<compile_context>
chip_gen: v7x
topology: tpu7x:2x2x1
jax: 0.10.0
libtpu: 0.0.40
codegen_flags: <defaults>
</compile_context>

<pallas_src>
import functools

import jax
import jax.numpy as jnp
from jax import lax
from jax.experimental import pallas as pl
from jax.experimental.pallas import tpu as pltpu


def _self_attention_kernel(xkv_ref, wq_ref, bq_ref, wk_ref, bk_ref,
                           wv_ref, bv_ref, gamma_ref, o_ref,
                           k_scr, v_scr, *, tq, n_valid, n_padded):
    # xkv_ref : (1, C, Np)  full-spatial input slab (channels on sublanes)
    # wq/wk   : (C8p, C), bq/bk : (C8p, 1)   (zero-padded rows)
    # wv      : (C, C),   bv    : (C, 1)
    # o_ref   : (1, C, TQ);  k_scr : (C8p, Np);  v_scr : (C, Np)
    qi = pl.program_id(1)

    # K / V projections once per batch element (qi-invariant), kept resident in
    # VMEM scratch across all query tiles of this batch element.
    @pl.when(qi == 0)
    def _():
        xkv = xkv_ref[0]                                           # (C, Np)
        k_scr[...] = (jnp.dot(wk_ref[...], xkv,
                              preferred_element_type=jnp.float32) + bk_ref[...])
        v_scr[...] = (jnp.dot(wv_ref[...], xkv,
                              preferred_element_type=jnp.float32) + bv_ref[...])

    # Query tile sliced from the resident slab (no second x input / DMA).
    start = pl.multiple_of(qi * tq, 128)
    xq = xkv_ref[0, :, pl.ds(start, tq)]                           # (C, TQ)

    q = (jnp.dot(wq_ref[...], xq, preferred_element_type=jnp.float32)
         + bq_ref[...])                                            # (C8p, TQ)

    # energy_t[j, i] = sum_c k[c, j] * q[c, i] -> (Np, TQ).  Contraction over
    # the channel/sublane axis; per review item 7 this lowering should be
    # checked in the bundle dump for an implicit k^T relayout (amortized here
    # to once per query tile, K is already hoisted to once per batch).
    energy_t = lax.dot_general(k_scr[...], q, (((0,), (0,)), ((), ())),
                               preferred_element_type=jnp.float32)

    # Numerically stable softmax over keys (axis 0); normalization deferred.
    m = jnp.max(energy_t, axis=0, keepdims=True)                   # (1, TQ)
    p = jnp.exp(energy_t - m)                                      # (Np, TQ)
    if n_padded != n_valid:
        # Zero the contribution of zero-padded key positions (static branch).
        key_idx = lax.broadcasted_iota(jnp.int32, (n_padded, tq), 0)
        p = jnp.where(key_idx < n_valid, p, 0.0)
    l = jnp.sum(p, axis=0, keepdims=True)                          # (1, TQ)

    # out_unnorm[c, i] = sum_j v[c, j] * p[j, i] -- plain MXU matmul.
    out_unnorm = jnp.dot(v_scr[...], p, preferred_element_type=jnp.float32)

    # Fold gamma and the softmax denominator into one lane-aligned scale
    # (exact divide keeps the 1e-4 match vs. the f32 reference).
    gamma = gamma_ref[0, 0]
    scale = gamma / l                                              # (1, TQ)
    o_ref[0] = (out_unnorm * scale + xq).astype(o_ref.dtype)


def _vmem_capacity_bytes():
    # Generation-aware VMEM capacity (64 MiB/TC on v7x, 128 MiB on v5e/v6e).
    try:
        info = pltpu.get_tpu_info()
        for attr in ("vmem_capacity_bytes", "vmem_bytes"):
            cap = getattr(info, attr, None)
            if cap:
                return int(cap)
    except Exception:
        pass
    return 64 * 1024 * 1024          # conservative fallback (v7x per-TC)


def _estimate_vmem_bytes(c, c8p, n_padded, tq):
    f32 = 4
    xkv = 2 * c * n_padded * f32                  # double-buffered input slab
    scratch = (c8p + c) * n_padded * f32          # persistent K / V scratch
    out = 2 * c * tq * f32                        # double-buffered output block
    softmax = 2 * n_padded * tq * f32             # energy_t + p
    work = (2 * c8p + 2 * c) * tq * f32           # q, xq, out_unnorm, residual
    small = (2 * c8p * c + c * c + 2 * c8p + c) * f32
    return xkv + scratch + out + softmax + work + small


def _pick_query_tile(c, c8p, n_padded, budget_bytes):
    # Largest lane-aligned (multiple of 128) tile dividing Np whose working set
    # fits the budget; on 128-MiB single-TC chips this is usually TQ == Np.
    tq = n_padded
    while tq >= 128:
        if n_padded % tq == 0 and _estimate_vmem_bytes(c, c8p, n_padded, tq) <= budget_bytes:
            return tq
        tq -= 128
    return 128


def self_attention(x_nchw, wq, bq, wk, bk, wv, bv, gamma):
    """x_nchw: (B, C, H, W). wq/wk: (C//8, C), wv: (C, C), biases 1-D, gamma scalar."""
    B, C, H, W = x_nchw.shape
    N = H * W
    Np = ((N + 127) // 128) * 128        # lane-align the spatial axis
    C8 = wq.shape[0]
    C8p = ((C8 + 7) // 8) * 8            # pad q/k channels to a full sublane tile
    dt = x_nchw.dtype

    # NCHW -> (B, C, N) is a pure reshape; zero-pad the spatial tail (padded
    # key positions are masked inside the kernel, padded query columns are
    # sliced off afterwards).
    x_cn = x_nchw.reshape(B, C, N)
    if Np != N:
        x_cn = jnp.pad(x_cn, ((0, 0), (0, 0), (0, Np - N)))

    # Zero-pad q/k weights & biases (zero rows contribute nothing to energy).
    wq_p = jnp.zeros((C8p, C), dt).at[:C8].set(wq)
    wk_p = jnp.zeros((C8p, C), dt).at[:C8].set(wk)
    bq_p = jnp.zeros((C8p, 1), dt).at[:C8, 0].set(bq)
    bk_p = jnp.zeros((C8p, 1), dt).at[:C8, 0].set(bk)
    bv_p = bv.reshape(C, 1).astype(dt)
    gamma2 = jnp.reshape(gamma, (1, 1)).astype(jnp.float32)

    cap = _vmem_capacity_bytes()
    tile_budget = (cap * 9) // 16        # ~36 MiB on v7x, ~72 MiB on v5e/v6e
    vmem_limit = min((cap * 3) // 4, 128 * 1024 * 1024)
    TQ = _pick_query_tile(C, C8p, Np, tile_budget)
    n_q_blocks = Np // TQ

    kernel = functools.partial(_self_attention_kernel,
                               tq=TQ, n_valid=N, n_padded=Np)

    out_cn = pl.pallas_call(
        kernel,
        out_shape=jax.ShapeDtypeStruct((B, C, Np), dt),
        grid=(B, n_q_blocks),
        in_specs=[
            pl.BlockSpec((1, C, Np), lambda b, qi: (b, 0, 0)),   # x slab (per-b, qi-invariant)
            pl.BlockSpec((C8p, C), lambda b, qi: (0, 0)),        # Wq (padded)
            pl.BlockSpec((C8p, 1), lambda b, qi: (0, 0)),        # bq (padded)
            pl.BlockSpec((C8p, C), lambda b, qi: (0, 0)),        # Wk (padded)
            pl.BlockSpec((C8p, 1), lambda b, qi: (0, 0)),        # bk (padded)
            pl.BlockSpec((C, C), lambda b, qi: (0, 0)),          # Wv
            pl.BlockSpec((C, 1), lambda b, qi: (0, 0)),          # bv
            pl.BlockSpec(memory_space=pltpu.SMEM),               # gamma scalar
        ],
        out_specs=pl.BlockSpec((1, C, TQ), lambda b, qi: (b, 0, qi)),
        scratch_shapes=[
            pltpu.VMEM((C8p, Np), jnp.float32),                  # K (persists over qi)
            pltpu.VMEM((C, Np), jnp.float32),                    # V (persists over qi)
        ],
        compiler_params=pltpu.CompilerParams(
            # Only the batch axis is megacore-parallel: the qi axis carries the
            # K/V scratch init (qi == 0) dependency, so it must stay serial.
            dimension_semantics=("parallel", "arbitrary"),
            vmem_limit_bytes=vmem_limit),
    )(x_cn, wq_p, bq_p, wk_p, bk_p, wv, bv_p, gamma2)

    # Drop spatial padding; (B, C, N) -> NCHW is a pure reshape.
    return out_cn[:, :, :N].reshape(B, C, H, W)


def self_attention_ref(x_nchw, wq, bq, wk, bk, wv, bv, gamma):
    """Pure-JAX reference mirroring the PyTorch forward exactly."""
    B, C, H, W = x_nchw.shape
    N = H * W
    xf = x_nchw.reshape(B, C, N)
    q = jnp.einsum('oc,bcn->bon', wq, xf) + bq[None, :, None]   # (B, C8, N)
    k = jnp.einsum('oc,bcn->bon', wk, xf) + bk[None, :, None]   # (B, C8, N)
    v = jnp.einsum('oc,bcn->bon', wv, xf) + bv[None, :, None]   # (B, C, N)
    energy = jnp.einsum('bci,bcj->bij', q, k)                   # (B, N, N)
    attn = jax.nn.softmax(energy, axis=-1)
    out = jnp.einsum('bcj,bij->bci', v, attn)                   # (B, C, N)
    return gamma * out.reshape(B, C, H, W) + x_nchw


if __name__ == "__main__":
    def _run_case(B, C, H, W, seed):
        C8 = C // 8
        key = jax.random.PRNGKey(seed)
        kx, kq, kk, kv, kbq, kbk, kbv = jax.random.split(key, 7)

        x = jax.random.normal(kx, (B, C, H, W), dtype=jnp.float32)
        wq = 0.1 * jax.random.normal(kq, (C8, C), dtype=jnp.float32)   # query conv1x1
        wk = 0.1 * jax.random.normal(kk, (C8, C), dtype=jnp.float32)   # key   conv1x1
        wv = 0.1 * jax.random.normal(kv, (C, C), dtype=jnp.float32)    # value conv1x1
        bq = 0.01 * jax.random.normal(kbq, (C8,), dtype=jnp.float32)
        bk = 0.01 * jax.random.normal(kbk, (C8,), dtype=jnp.float32)
        bv = 0.01 * jax.random.normal(kbv, (C,), dtype=jnp.float32)
        # nn.Parameter(torch.zeros(1)) -> zero would make the output trivially x;
        # use a nonzero deterministic value to exercise the full path.
        gamma = jnp.float32(0.5)

        out = jax.block_until_ready(self_attention(x, wq, bq, wk, bk, wv, bv, gamma))
        ref = self_attention_ref(x, wq, bq, wk, bk, wv, bv, gamma)
        assert out.shape == (B, C, H, W)
        assert jnp.allclose(out, ref, atol=1e-4, rtol=1e-4), \
            f"mismatch vs reference (B={B}, C={C}, H={H}, W={W})"

    _run_case(2, 32, 16, 16, 0)   # N = 256: lane-aligned, multi-batch path
    _run_case(1, 16, 12, 12, 1)   # N = 144 -> padded to 256: masked-key path
    print("KERNEL_OK")
</pallas_src>

<mosaic_0001>
module attributes {stable_mosaic.version = 11 : i64} {
  func.func @_self_attention_kernel(%arg0: i32, %arg1: i32, %arg2: memref<1x32x256xf32, #tpu.memory_space<vmem>>, %arg3: memref<8x32xf32, #tpu.memory_space<vmem>>, %arg4: memref<8x1xf32, #tpu.memory_space<vmem>>, %arg5: memref<8x32xf32, #tpu.memory_space<vmem>>, %arg6: memref<8x1xf32, #tpu.memory_space<vmem>>, %arg7: memref<32x32xf32, #tpu.memory_space<vmem>>, %arg8: memref<32x1xf32, #tpu.memory_space<vmem>>, %arg9: memref<1x1xf32, #tpu.memory_space<smem>>, %arg10: memref<1x32x256xf32, #tpu.memory_space<vmem>>, %arg11: memref<8x256xf32, #tpu.memory_space<vmem>>, %arg12: memref<32x256xf32, #tpu.memory_space<vmem>>) attributes {dimension_semantics = [#tpu.dimension_semantics<parallel>, #tpu.dimension_semantics<arbitrary>], iteration_bounds = array<i64: 2, 1>, scalar_prefetch = 0 : i64, scratch_operands = 2 : i64, tpu.core_type = #tpu.core_type<tc>, window_params = [{transform_indices = @transform_0, window_bounds = array<i64: 1, 32, 256>}, {pipeline_mode = #tpu.pipeline_mode<synchronous>, transform_indices = @transform_1, window_bounds = array<i64: 8, 32>}, {pipeline_mode = #tpu.pipeline_mode<synchronous>, transform_indices = @transform_2, window_bounds = array<i64: 8, 1>}, {pipeline_mode = #tpu.pipeline_mode<synchronous>, transform_indices = @transform_3, window_bounds = array<i64: 8, 32>}, {pipeline_mode = #tpu.pipeline_mode<synchronous>, transform_indices = @transform_4, window_bounds = array<i64: 8, 1>}, {pipeline_mode = #tpu.pipeline_mode<synchronous>, transform_indices = @transform_5, window_bounds = array<i64: 32, 32>}, {pipeline_mode = #tpu.pipeline_mode<synchronous>, transform_indices = @transform_6, window_bounds = array<i64: 32, 1>}, {transform_indices = @transform_7, window_bounds = array<i64: 1, 1>}, {transform_indices = @transform_8, window_bounds = array<i64: 1, 32, 256>}]} {
    %c0_i32 = arith.constant 0 : i32
    %0 = arith.cmpi eq, %arg1, %c0_i32 : i32
    %1 = arith.extui %0 : i1 to i32
    %c0_i32_0 = arith.constant 0 : i32
    %2 = arith.cmpi ne, %1, %c0_i32_0 : i32
    scf.if %2 {
      %c0_19 = arith.constant 0 : index
      %c0_20 = arith.constant 0 : index
      %c0_21 = arith.constant 0 : index
      %33 = vector.load %arg2[%c0_19, %c0_20, %c0_21] : memref<1x32x256xf32, #tpu.memory_space<vmem>>, vector<1x32x256xf32>
      %34 = vector.shape_cast %33 : vector<1x32x256xf32> to vector<32x256xf32>
      %c0_22 = arith.constant 0 : index
      %c0_23 = arith.constant 0 : index
      %35 = vector.load %arg5[%c0_22, %c0_23] : memref<8x32xf32, #tpu.memory_space<vmem>>, vector<8x32xf32>
      %cst_24 = arith.constant dense<0.000000e+00> : vector<8x256xf32>
      %36 = tpu.matmul %35, %34, %cst_24 {dimension_numbers = #tpu.dot_dimension_numbers<[1], [0], [0], [1], [0, 0, 1, 1], [], []>} : vector<8x32xf32>, vector<32x256xf32>, vector<8x256xf32> -> vector<8x256xf32>
      %c0_25 = arith.constant 0 : index
      %c0_26 = arith.constant 0 : index
      %37 = vector.load %arg6[%c0_25, %c0_26] : memref<8x1xf32, #tpu.memory_space<vmem>>, vector<8x1xf32>
      %38 = vector.broadcast %37 : vector<8x1xf32> to vector<8x256xf32>
      %39 = arith.addf %36, %38 : vector<8x256xf32>
      %c0_27 = arith.constant 0 : index
      %c0_28 = arith.constant 0 : index
      %40 = vector.load %arg11[%c0_27, %c0_28] : memref<8x256xf32, #tpu.memory_space<vmem>>, vector<8x256xf32>
      tpu.vector_store %arg11[%c0_27, %c0_28], %39 {strides = array<i32>} : memref<8x256xf32, #tpu.memory_space<vmem>>, vector<8x256xf32>,
      %c0_29 = arith.constant 0 : index
      %c0_30 = arith.constant 0 : index
      %41 = vector.load %arg7[%c0_29, %c0_30] : memref<32x32xf32, #tpu.memory_space<vmem>>, vector<32x32xf32>
      %cst_31 = arith.constant dense<0.000000e+00> : vector<32x256xf32>
      %42 = tpu.matmul %41, %34, %cst_31 {dimension_numbers = #tpu.dot_dimension_numbers<[1], [0], [0], [1], [0, 0, 1, 1], [], []>} : vector<32x32xf32>, vector<32x256xf32>, vector<32x256xf32> -> vector<32x256xf32>
      %c0_32 = arith.constant 0 : index
      %c0_33 = arith.constant 0 : index
      %43 = vector.load %arg8[%c0_32, %c0_33] : memref<32x1xf32, #tpu.memory_space<vmem>>, vector<32x1xf32>
      %44 = vector.broadcast %43 : vector<32x1xf32> to vector<32x256xf32>
      %45 = arith.addf %42, %44 : vector<32x256xf32>
      %c0_34 = arith.constant 0 : index
      %c0_35 = arith.constant 0 : index
      %46 = vector.load %arg12[%c0_34, %c0_35] : memref<32x256xf32, #tpu.memory_space<vmem>>, vector<32x256xf32>
      tpu.vector_store %arg12[%c0_34, %c0_35], %45 {strides = array<i32>} : memref<32x256xf32, #tpu.memory_space<vmem>>, vector<32x256xf32>,
    } else {
    }
    %c256_i32 = arith.constant 256 : i32
    %3 = arith.muli %arg1, %c256_i32 : i32
    %4 = tpu.assume_multiple %3, 128 : i32
    %c0 = arith.constant 0 : index
    %c0_1 = arith.constant 0 : index
    %5 = arith.index_cast %4 : i32 to index
    %6 = vector.load %arg2[%c0, %c0_1, %5] : memref<1x32x256xf32, #tpu.memory_space<vmem>>, vector<1x32x256xf32>
    %7 = vector.shape_cast %6 : vector<1x32x256xf32> to vector<32x256xf32>
    %c0_2 = arith.constant 0 : index
    %c0_3 = arith.constant 0 : index
    %8 = vector.load %arg3[%c0_2, %c0_3] : memref<8x32xf32, #tpu.memory_space<vmem>>, vector<8x32xf32>
    %cst = arith.constant dense<0.000000e+00> : vector<8x256xf32>
    %9 = tpu.matmul %8, %7, %cst {dimension_numbers = #tpu.dot_dimension_numbers<[1], [0], [0], [1], [0, 0, 1, 1], [], []>} : vector<8x32xf32>, vector<32x256xf32>, vector<8x256xf32> -> vector<8x256xf32>
    %c0_4 = arith.constant 0 : index
    %c0_5 = arith.constant 0 : index
    %10 = vector.load %arg4[%c0_4, %c0_5] : memref<8x1xf32, #tpu.memory_space<vmem>>, vector<8x1xf32>
    %11 = vector.broadcast %10 : vector<8x1xf32> to vector<8x256xf32>
    %12 = arith.addf %9, %11 : vector<8x256xf32>
    %c0_6 = arith.constant 0 : index
    %c0_7 = arith.constant 0 : index
    %13 = vector.load %arg11[%c0_6, %c0_7] : memref<8x256xf32, #tpu.memory_space<vmem>>, vector<8x256xf32>
    %cst_8 = arith.constant dense<0.000000e+00> : vector<256x256xf32>
    %14 = tpu.matmul %13, %12, %cst_8 {dimension_numbers = #tpu.dot_dimension_numbers<[0], [0], [1], [1], [0, 1, 1, 1], [], []>} : vector<8x256xf32>, vector<8x256xf32>, vector<256x256xf32> -> vector<256x256xf32>
    %cst_9 = arith.constant dense<0xFF800000> : vector<256xf32>
    %15 = vector.multi_reduction <maximumf>, %14, %cst_9 [0] : vector<256x256xf32> to vector<256xf32>
    %16 = vector.shape_cast %15 : vector<256xf32> to vector<1x256xf32>
    %17 = vector.broadcast %16 : vector<1x256xf32> to vector<256x256xf32>
    %18 = arith.subf %14, %17 : vector<256x256xf32>
    %19 = math.exp %18 : vector<256x256xf32>
    %cst_10 = arith.constant dense<0.000000e+00> : vector<256xf32>
    %20 = vector.multi_reduction <add>, %19, %cst_10 [0] : vector<256x256xf32> to vector<256xf32>
    %21 = vector.shape_cast %20 : vector<256xf32> to vector<1x256xf32>
    %c0_11 = arith.constant 0 : index
    %c0_12 = arith.constant 0 : index
    %22 = vector.load %arg12[%c0_11, %c0_12] : memref<32x256xf32, #tpu.memory_space<vmem>>, vector<32x256xf32>
    %cst_13 = arith.constant dense<0.000000e+00> : vector<32x256xf32>
    %23 = tpu.matmul %22, %19, %cst_13 {dimension_numbers = #tpu.dot_dimension_numbers<[1], [0], [0], [1], [0, 0, 1, 1], [], []>} : vector<32x256xf32>, vector<256x256xf32>, vector<32x256xf32> -> vector<32x256xf32>
    %c0_14 = arith.constant 0 : index
    %c0_15 = arith.constant 0 : index
    %24 = memref.load %arg9[%c0_14, %c0_15] : memref<1x1xf32, #tpu.memory_space<smem>>
    %25 = vector.broadcast %24 : f32 to vector<1x256xf32>
    %26 = arith.divf %25, %21 : vector<1x256xf32>
    %27 = vector.broadcast %26 : vector<1x256xf32> to vector<32x256xf32>
    %28 = arith.mulf %23, %27 : vector<32x256xf32>
    %29 = arith.addf %28, %7 : vector<32x256xf32>
    %c0_16 = arith.constant 0 : index
    %c0_17 = arith.constant 0 : index
    %c0_18 = arith.constant 0 : index
    %30 = vector.load %arg10[%c0_16, %c0_17, %c0_18] : memref<1x32x256xf32, #tpu.memory_space<vmem>>, vector<1x32x256xf32>
    %31 = vector.shape_cast %30 : vector<1x32x256xf32> to vector<32x256xf32>
    %32 = vector.shape_cast %29 : vector<32x256xf32> to vector<1x32x256xf32>
    tpu.vector_store %arg10[%c0_16, %c0_17, %c0_18], %32 {strides = array<i32>} : memref<1x32x256xf32, #tpu.memory_space<vmem>>, vector<1x32x256xf32>,
    return
  }
  func.func @transform_0(%arg0: i32, %arg1: i32) -> (i32, i32, i32) {
    %c0_i32 = arith.constant 0 : i32
    %c0_i32_0 = arith.constant 0 : i32
    %c0_i32_1 = arith.constant 0 : i32
    return %arg0, %c0_i32, %c0_i32_0 : i32, i32, i32
  }
  func.func @transform_1(%arg0: i32, %arg1: i32) -> (i32, i32) {
    %c0_i32 = arith.constant 0 : i32
    %c0_i32_0 = arith.constant 0 : i32
    %c0_i32_1 = arith.constant 0 : i32
    return %c0_i32, %c0_i32_0 : i32, i32
  }
  func.func @transform_2(%arg0: i32, %arg1: i32) -> (i32, i32) {
    %c0_i32 = arith.constant 0 : i32
    %c0_i32_0 = arith.constant 0 : i32
    %c0_i32_1 = arith.constant 0 : i32
    return %c0_i32, %c0_i32_0 : i32, i32
  }
  func.func @transform_3(%arg0: i32, %arg1: i32) -> (i32, i32) {
    %c0_i32 = arith.constant 0 : i32
    %c0_i32_0 = arith.constant 0 : i32
    %c0_i32_1 = arith.constant 0 : i32
    return %c0_i32, %c0_i32_0 : i32, i32
  }
  func.func @transform_4(%arg0: i32, %arg1: i32) -> (i32, i32) {
    %c0_i32 = arith.constant 0 : i32
    %c0_i32_0 = arith.constant 0 : i32
    %c0_i32_1 = arith.constant 0 : i32
    return %c0_i32, %c0_i32_0 : i32, i32
  }
  func.func @transform_5(%arg0: i32, %arg1: i32) -> (i32, i32) {
    %c0_i32 = arith.constant 0 : i32
    %c0_i32_0 = arith.constant 0 : i32
    %c0_i32_1 = arith.constant 0 : i32
    return %c0_i32, %c0_i32_0 : i32, i32
  }
  func.func @transform_6(%arg0: i32, %arg1: i32) -> (i32, i32) {
    %c0_i32 = arith.constant 0 : i32
    %c0_i32_0 = arith.constant 0 : i32
    %c0_i32_1 = arith.constant 0 : i32
    return %c0_i32, %c0_i32_0 : i32, i32
  }
  func.func @transform_7(%arg0: i32, %arg1: i32) -> (i32, i32) {
    %c0_i32 = arith.constant 0 : i32
    %c0_i32_0 = arith.constant 0 : i32
    %c0_i32_1 = arith.constant 0 : i32
    return %c0_i32, %c0_i32_0 : i32, i32
  }
  func.func @transform_8(%arg0: i32, %arg1: i32) -> (i32, i32, i32) {
    %c0_i32 = arith.constant 0 : i32
    %c0_i32_0 = arith.constant 0 : i32
    return %arg0, %c0_i32, %arg1 : i32, i32, i32
  }
}

</mosaic_0001>

<llo_original>
// kernel: tpu_custom_call.1
$region0: #{tpu_custom_call.1}
  #allocation0 [shape = 'u32[]', space=smem, size = 0x4, offset = 0x4, fixed_abs, tag = 'smem constant byte address 0x4 - core index']
  #allocation1 [shape = 'u32[144,128]{1,0:T(1,128)}', space=vmem, size = 0x12000, scoped, tag = 'internal scratch']
  #allocation2 [shape = 'f32[8,256]{1,0:T(8,128)}', space=vmem, size = 0x2000, scoped, tag = 'scratch operand']
  #allocation3 [shape = 'f32[32,256]{1,0:T(8,128)}', space=vmem, size = 0x8000, scoped, tag = 'scratch operand']
  #allocation4 [shape = 'f32[1,1]{1,0:T(1,128)S(6)}', space=smem, size = 0x200, scoped, tag = 'scoped memory for tpu_custom_call.1']
  %s0 = inlined_call_operand.hbm [shape: f32[2,32,256], index: 0, kind: input, shape index: {}]
  %s1 = inlined_call_operand.vmem [shape: f32[8,32], index: 1, kind: input, shape index: {}]
  %s2 = inlined_call_operand.vmem [shape: f32[8,1], index: 2, kind: input, shape index: {}]
  %s3 = inlined_call_operand.vmem [shape: f32[8,32], index: 3, kind: input, shape index: {}]
  %s4 = inlined_call_operand.vmem [shape: f32[8,1], index: 4, kind: input, shape index: {}]
  %s5 = inlined_call_operand.vmem [shape: f32[32,32], index: 5, kind: input, shape index: {}]
  %s6 = inlined_call_operand.vmem [shape: f32[32,1], index: 6, kind: input, shape index: {}]
  %s7 = inlined_call_operand.<no memory space> [shape: f32[1,1], index: 7, kind: input, shape index: {}]
  %s8 = inlined_call_operand.hbm [shape: f32[2,32,256], index: 8, kind: output, shape index: {}]
  %s9 = sld [smem:[#allocation0]]
  $region73: #{tpu_custom_call.1} parent=0
    _
  %s11 = ssub.s32 1, %s9
  %s12 = scalar_select 0, %s11, %s9
  %13 = sst [smem:[#allocation4]] %s7
  $region1: #{tpu_custom_call.1} parent=0
    #allocation5 [shape = 'u8[65536]{0}', space=vmem, size = 0x10000, scoped, tag = 'input window, operand 0']
    #allocation6 [shape = 's32[2]{0}', space=sflag, size = 0x8, scoped, tag = 'scoped memory for tpu_custom_call.1']
    #allocation7 [shape = 's32[2]{0}', space=sflag, size = 0x8, scoped, tag = 'scoped memory for tpu_custom_call.1']
    #allocation8 [shape = 'u8[65536]{0}', space=vmem, size = 0x10000, scoped, tag = 'output window, operand 0']
    %14 = vsyncpa [#allocation6], 0
    %s15 = scalar_lea.sflag [#allocation6], 1
    %16 = vsyncpa %s15, 0
    %17 = vsyncpa [#allocation7], 0
    %s18 = scalar_lea.sflag [#allocation7], 1
    %19 = vsyncpa %s18, 0
    loop: start=0, step=1, limit=4
    $region2: #{tpu_custom_call.1} parent=1 // loop_pre_header
      _
    $region3: #{tpu_custom_call.1} parent=1 // loop_header
      %s21 = sphi 0, %s25
      %p22 = scmp.ge.s32.totalorder %s21, 4
      %s28 = sphi 0, %s40
      %s29 = sphi 0, %s36
      %s30 = sphi 0, %s28
      %s31 = sphi 0, %s29
      %s32 = sphi 0, %s30
      %s33 = sphi 0, %s31
      %s43 = sphi 0, %s45
      %s46 = sphi 0, %s43
      %s47 = sphi 0, %s46
      %s63 = sphi 0, %s47
      %s67 = sphi 0, %s67
      %s69 = sphi 0, %s67
      %s70 = sphi 0, %s69
      %s84 = sphi 0, %s70
      %s88 = sphi 0, %s88
      %s90 = sphi 0, %s88
      %s91 = sphi 0, %s90
      %s105 = sphi 0, %s91
      %s109 = sphi 0, %s109
      %s111 = sphi 0, %s109
      %s112 = sphi 0, %s111
      %s126 = sphi 0, %s112
      %s130 = sphi 0, %s130
      %s132 = sphi 0, %s130
      %s133 = sphi 0, %s132
      %s147 = sphi 0, %s133
      %s151 = sphi 0, %s151
      %s153 = sphi 0, %s151
      %s154 = sphi 0, %s153
      %s168 = sphi 0, %s154
      %s172 = sphi 0, %s172
      %s174 = sphi 0, %s172
      %s175 = sphi 0, %s174
      %s189 = sphi 0, %s175
      %s193 = sphi 0, %s193
      %s195 = sphi 0, %s193
      %s196 = sphi 0, %s195
      %s210 = sphi 0, %s196
      %s218 = sphi 0, %s220
      %s221 = sphi 0, %s218
      %s222 = sphi 0, %s221
      %s238 = sphi 0, %s222
    $region4: #{tpu_custom_call.1} parent=1 // loop_header_branch
      %24 = sbr.rel (%p22) target = $region8
    $region5: #{tpu_custom_call.1} parent=1 // loop_body
      %s26 = ssub.s32 %s21, 1
      %s27 = ssub.s32 %s21, 2
      %s34 = sadd.s32 1, %s29
      %p35 = scmp.ge.s32.totalorder %s34, 1
      %s36 = scalar_select %p35, 0, %s34
      %s37 = sadd.s32 1, %s28
      %s38 = scalar_select %p35, %s37, %s28
      %p39 = scmp.ge.s32.totalorder %s38, 2
      %s40 = scalar_select %p39, 0, %s38
      %s41 = ssub.s32 %s28, %s40
      %p42 = scmp.eq.s32.totalorder %s41, 0
      %s44 = sadd.s32 %s43, 1
      %s45 = scalar_select %p42, %s43, %s44
      %p48 = pneg %p42
      %p49 = scmp.eq.s32.totalorder %s21, 1
      %p50 = por %p48, %p49
      %p51 = scmp.ne.s32.totalorder %s43, %s46
      %p52 = scmp.eq.s32.totalorder %s21, 0
      %p53 = por %p51, %p52
      %p54 = scmp.ne.s32.totalorder %s43, %s46
      %p55 = scmp.eq.s32.totalorder %s26, 1
      %p56 = por %p54, %p55
      %p57 = scmp.ne.s32.totalorder %s46, %s47
      %p58 = scmp.eq.s32.totalorder %s26, 0
      %p59 = por %p57, %p58
      %p60 = scmp.ne.s32.totalorder %s46, %s47
      %p61 = scmp.eq.s32.totalorder %s27, 1
      %p62 = por %p60, %p61
      %p64 = scmp.ne.s32.totalorder %s47, %s63
      %p65 = scmp.eq.s32.totalorder %s27, 0
      %p66 = por %p64, %p65
      %s68 = sadd.s32 %s67, 1
      %p71 = scmp.eq.s32.totalorder %s21, 1
      %p72 = scmp.ne.s32.totalorder %s67, %s69
      %p73 = scmp.eq.s32.totalorder %s21, 0
      %p74 = por %p72, %p73
      %p75 = scmp.ne.s32.totalorder %s67, %s69
      %p76 = scmp.eq.s32.totalorder %s26, 1
      %p77 = por %p75, %p76
      %p78 = scmp.ne.s32.totalorder %s69, %s70
      %p79 = scmp.eq.s32.totalorder %s26, 0
      %p80 = por %p78, %p79
      %p81 = scmp.ne.s32.totalorder %s69, %s70
      %p82 = scmp.eq.s32.totalorder %s27, 1
      %p83 = por %p81, %p82
      %p85 = scmp.ne.s32.totalorder %s70, %s84
      %p86 = scmp.eq.s32.totalorder %s27, 0
      %p87 = por %p85, %p86
      %s89 = sadd.s32 %s88, 1
      %p92 = scmp.eq.s32.totalorder %s21, 1
      %p93 = scmp.ne.s32.totalorder %s88, %s90
      %p94 = scmp.eq.s32.totalorder %s21, 0
      %p95 = por %p93, %p94
      %p96 = scmp.ne.s32.totalorder %s88, %s90
      %p97 = scmp.eq.s32.totalorder %s26, 1
      %p98 = por %p96, %p97
      %p99 = scmp.ne.s32.totalorder %s90, %s91
      %p100 = scmp.eq.s32.totalorder %s26, 0
      %p101 = por %p99, %p100
      %p102 = scmp.ne.s32.totalorder %s90, %s91
      %p103 = scmp.eq.s32.totalorder %s27, 1
      %p104 = por %p102, %p103
      %p106 = scmp.ne.s32.totalorder %s91, %s105
      %p107 = scmp.eq.s32.totalorder %s27, 0
      %p108 = por %p106, %p107
      %s110 = sadd.s32 %s109, 1
      %p113 = scmp.eq.s32.totalorder %s21, 1
      %p114 = scmp.ne.s32.totalorder %s109, %s111
      %p115 = scmp.eq.s32.totalorder %s21, 0
      %p116 = por %p114, %p115
      %p117 = scmp.ne.s32.totalorder %s109, %s111
      %p118 = scmp.eq.s32.totalorder %s26, 1
      %p119 = por %p117, %p118
      %p120 = scmp.ne.s32.totalorder %s111, %s112
      %p121 = scmp.eq.s32.totalorder %s26, 0
      %p122 = por %p120, %p121
      %p123 = scmp.ne.s32.totalorder %s111, %s112
      %p124 = scmp.eq.s32.totalorder %s27, 1
      %p125 = por %p123, %p124
      %p127 = scmp.ne.s32.totalorder %s112, %s126
      %p128 = scmp.eq.s32.totalorder %s27, 0
      %p129 = por %p127, %p128
      %s131 = sadd.s32 %s130, 1
      %p134 = scmp.eq.s32.totalorder %s21, 1
      %p135 = scmp.ne.s32.totalorder %s130, %s132
      %p136 = scmp.eq.s32.totalorder %s21, 0
      %p137 = por %p135, %p136
      %p138 = scmp.ne.s32.totalorder %s130, %s132
      %p139 = scmp.eq.s32.totalorder %s26, 1
      %p140 = por %p138, %p139
      %p141 = scmp.ne.s32.totalorder %s132, %s133
      %p142 = scmp.eq.s32.totalorder %s26, 0
      %p143 = por %p141, %p142
      %p144 = scmp.ne.s32.totalorder %s132, %s133
      %p145 = scmp.eq.s32.totalorder %s27, 1
      %p146 = por %p144, %p145
      %p148 = scmp.ne.s32.totalorder %s133, %s147
      %p149 = scmp.eq.s32.totalorder %s27, 0
      %p150 = por %p148, %p149
      %s152 = sadd.s32 %s151, 1
      %p155 = scmp.eq.s32.totalorder %s21, 1
      %p156 = scmp.ne.s32.totalorder %s151, %s153
      %p157 = scmp.eq.s32.totalorder %s21, 0
      %p158 = por %p156, %p157
      %p159 = scmp.ne.s32.totalorder %s151, %s153
      %p160 = scmp.eq.s32.totalorder %s26, 1
      %p161 = por %p159, %p160
      %p162 = scmp.ne.s32.totalorder %s153, %s154
      %p163 = scmp.eq.s32.totalorder %s26, 0
      %p164 = por %p162, %p163
      %p165 = scmp.ne.s32.totalorder %s153, %s154
      %p166 = scmp.eq.s32.totalorder %s27, 1
      %p167 = por %p165, %p166
      %p169 = scmp.ne.s32.totalorder %s154, %s168
      %p170 = scmp.eq.s32.totalorder %s27, 0
      %p171 = por %p169, %p170
      %s173 = sadd.s32 %s172, 1
      %p176 = scmp.eq.s32.totalorder %s21, 1
      %p177 = scmp.ne.s32.totalorder %s172, %s174
      %p178 = scmp.eq.s32.totalorder %s21, 0
      %p179 = por %p177, %p178
      %p180 = scmp.ne.s32.totalorder %s172, %s174
      %p181 = scmp.eq.s32.totalorder %s26, 1
      %p182 = por %p180, %p181
      %p183 = scmp.ne.s32.totalorder %s174, %s175
      %p184 = scmp.eq.s32.totalorder %s26, 0
      %p185 = por %p183, %p184
      %p186 = scmp.ne.s32.totalorder %s174, %s175
      %p187 = scmp.eq.s32.totalorder %s27, 1
      %p188 = por %p186, %p187
      %p190 = scmp.ne.s32.totalorder %s175, %s189
      %p191 = scmp.eq.s32.totalorder %s27, 0
      %p192 = por %p190, %p191
      %s194 = sadd.s32 %s193, 1
      %p197 = scmp.eq.s32.totalorder %s21, 1
      %p198 = scmp.ne.s32.totalorder %s193, %s195
      %p199 = scmp.eq.s32.totalorder %s21, 0
      %p200 = por %p198, %p199
      %p201 = scmp.ne.s32.totalorder %s193, %s195
      %p202 = scmp.eq.s32.totalorder %s26, 1
      %p203 = por %p201, %p202
      %p204 = scmp.ne.s32.totalorder %s195, %s196
      %p205 = scmp.eq.s32.totalorder %s26, 0
      %p206 = por %p204, %p205
      %p207 = scmp.ne.s32.totalorder %s195, %s196
      %p208 = scmp.eq.s32.totalorder %s27, 1
      %p209 = por %p207, %p208
      %p211 = scmp.ne.s32.totalorder %s196, %s210
      %p212 = scmp.eq.s32.totalorder %s27, 0
      %p213 = por %p211, %p212
      %s214 = ssub.s32 %s28, %s40
      %s215 = ssub.s32 %s29, %s36
      %s216 = sor.u32 %s214, %s215
      %p217 = scmp.eq.s32.totalorder %s216, 0
      %s219 = sadd.s32 %s218, 1
      %s220 = scalar_select %p217, %s218, %s219
      %p223 = pneg %p217
      %p224 = scmp.eq.s32.totalorder %s21, 1
      %p225 = por %p223, %p224
      %p226 = scmp.ne.s32.totalorder %s218, %s221
      %p227 = scmp.eq.s32.totalorder %s21, 0
      %p228 = por %p226, %p227
      %p229 = scmp.ne.s32.totalorder %s218, %s221
      %p230 = scmp.eq.s32.totalorder %s26, 1
      %p231 = por %p229, %p230
      %p232 = scmp.ne.s32.totalorder %s221, %s222
      %p233 = scmp.eq.s32.totalorder %s26, 0
      %p234 = por %p232, %p233
      %p235 = scmp.ne.s32.totalorder %s221, %s222
      %p236 = scmp.eq.s32.totalorder %s27, 1
      %p237 = por %p235, %p236
      %p239 = scmp.ne.s32.totalorder %s222, %s238
      %p240 = scmp.eq.s32.totalorder %s27, 0
      %p241 = por %p239, %p240
      %p242 = scmp.le.s32.totalorder 1, %s21
      %p243 = scmp.lt.s32.totalorder %s21, 3
      %p244 = pnand %p242, %p243
      %p245 = pneg %p244
      // Predicated region
      $region9: #{tpu_custom_call.1} parent=5 // pred_check
        _
      $region10: #{tpu_custom_call.1} parent=5 // pred_check_branch
        %247 = sbr.rel (%p244) target = $region12
      $region11: #{tpu_custom_call.1} parent=5 // pred_region
        %s248 = ssub.s32 %s21, 1
        // Predicated region
        $region13: #{tpu_custom_call.1} parent=11 // pred_check
          %p249 = pneg %p80
        $region14: #{tpu_custom_call.1} parent=11 // pred_check_branch
          %251 = sbr.rel (%p249) target = $region16
        $region15: #{tpu_custom_call.1} parent=11 // pred_region
          _
        $region16: #{tpu_custom_call.1} parent=11 // pred_fallthru
          _
        // Predicated region
        $region17: #{tpu_custom_call.1} parent=11 // pred_check
          %p252 = pneg %p101
        $region18: #{tpu_custom_call.1} parent=11 // pred_check_branch
          %254 = sbr.rel (%p252) target = $region20
        $region19: #{tpu_custom_call.1} parent=11 // pred_region
          _
        $region20: #{tpu_custom_call.1} parent=11 // pred_fallthru
          _
        // Predicated region
        $region21: #{tpu_custom_call.1} parent=11 // pred_check
          %p255 = pneg %p122
        $region22: #{tpu_custom_call.1} parent=11 // pred_check_branch
          %257 = sbr.rel (%p255) target = $region24
        $region23: #{tpu_custom_call.1} parent=11 // pred_region
          _
        $region24: #{tpu_custom_call.1} parent=11 // pred_fallthru
          _
        // Predicated region
        $region25: #{tpu_custom_call.1} parent=11 // pred_check
          %p258 = pneg %p143
        $region26: #{tpu_custom_call.1} parent=11 // pred_check_branch
          %260 = sbr.rel (%p258) target = $region28
        $region27: #{tpu_custom_call.1} parent=11 // pred_region
          _
        $region28: #{tpu_custom_call.1} parent=11 // pred_fallthru
          _
        // Predicated region
        $region29: #{tpu_custom_call.1} parent=11 // pred_check
          %p261 = pneg %p164
        $region30: #{tpu_custom_call.1} parent=11 // pred_check_branch
          %263 = sbr.rel (%p261) target = $region32
        $region31: #{tpu_custom_call.1} parent=11 // pred_region
          _
        $region32: #{tpu_custom_call.1} parent=11 // pred_fallthru
          _
        // Predicated region
        $region33: #{tpu_custom_call.1} parent=11 // pred_check
          %p264 = pneg %p185
        $region34: #{tpu_custom_call.1} parent=11 // pred_check_branch
          %266 = sbr.rel (%p264) target = $region36
        $region35: #{tpu_custom_call.1} parent=11 // pred_region
          _
        $region36: #{tpu_custom_call.1} parent=11 // pred_fallthru
          _
        // Predicated region
        $region37: #{tpu_custom_call.1} parent=11 // pred_check
          %p267 = pneg %p206
        $region38: #{tpu_custom_call.1} parent=11 // pred_check_branch
          %269 = sbr.rel (%p267) target = $region40
        $region39: #{tpu_custom_call.1} parent=11 // pred_region
          _
        $region40: #{tpu_custom_call.1} parent=11 // pred_fallthru
          _
      $region12: #{tpu_custom_call.1} parent=5 // pred_fallthru
        _
      %p270 = scmp.lt.s32.totalorder %s21, 2
      // Predicated region
      $region41: #{tpu_custom_call.1} parent=5 // pred_check
        %p271 = pneg %p270
      $region42: #{tpu_custom_call.1} parent=5 // pred_check_branch
        %273 = sbr.rel (%p271) target = $region44
      $region43: #{tpu_custom_call.1} parent=5 // pred_region
        // Predicated region
        $region45: #{tpu_custom_call.1} parent=43 // pred_check
          %p274 = pneg %p53
        $region46: #{tpu_custom_call.1} parent=43 // pred_check_branch
          %276 = sbr.rel (%p274) target = $region48
        $region47: #{tpu_custom_call.1} parent=43 // pred_region
          %s277 = sand.u32 %s43, 1
          %s278 = scalar_lea.sflag [#allocation6], %s277
          %s279 = sand.u32 %s43, 1
          %s280 = smul.addr %s279, 64
          %s281 = scalar_lea.vmem [#allocation5], %s280
          %s283 = ssub.s32 1024, 1024
          %284 = vsyncadd %s278, %s283
          %s285 = smul.addr %s28, 8
          %s286 = smul.addr %s285, 128
          %s287 = scalar_lea.hbm %s0, %s286
          %s288 = sshll.u32 %s281, 4
          %s289 = int_to_ptr.vmem [resolvable:$true] %s288
          %294 = dma.hbm_to_vmem [thread:$0]  %s287, 1024, %s289, %s278, 256, 256, 16
        $region48: #{tpu_custom_call.1} parent=43 // pred_fallthru
          _
      $region44: #{tpu_custom_call.1} parent=5 // pred_fallthru
        _
      %p295 = scmp.le.s32.totalorder 1, %s21
      %p296 = scmp.lt.s32.totalorder %s21, 3
      %p297 = pnand %p295, %p296
      %p298 = pneg %p297
      // Predicated region
      $region49: #{tpu_custom_call.1} parent=5 // pred_check
        _
      $region50: #{tpu_custom_call.1} parent=5 // pred_check_branch
        %300 = sbr.rel (%p297) target = $region52
      $region51: #{tpu_custom_call.1} parent=5 // pred_region
        %s301 = ssub.s32 %s21, 1
        %s302 = sand.u32 %s46, 1
        %s303 = scalar_lea.sflag [#allocation6], %s302
        %s304 = sand.u32 %s46, 1
        %s305 = smul.addr %s304, 64
        %s306 = scalar_lea.vmem [#allocation5], %s305
        // Predicated region
        $region53: #{tpu_custom_call.1} parent=51 // pred_check
          %p307 = pneg %p59
        $region54: #{tpu_custom_call.1} parent=51 // pred_check_branch
          %309 = sbr.rel (%p307) target = $region56
        $region55: #{tpu_custom_call.1} parent=51 // pred_region
          %310 = dma.done %s303, 1024
        $region56: #{tpu_custom_call.1} parent=51 // pred_fallthru
          _
        %s311 = sand.u32 %s46, 1
        %s312 = scalar_lea.sflag [#allocation6], %s311
        %s313 = sand.u32 %s46, 1
        %s314 = smul.addr %s313, 64
        %s315 = scalar_lea.vmem [#allocation5], %s314
        %p316 = pneg %p59
        %p317 = pneg %p56
        %p318 = pneg %p80
        %p319 = pneg %p77
        %p320 = pneg %p101
        %p321 = pneg %p98
        %p322 = pneg %p122
        %p323 = pneg %p119
        %p324 = pneg %p143
        %p325 = pneg %p140
        %p326 = pneg %p164
        %p327 = pneg %p161
        %p328 = pneg %p185
        %p329 = pneg %p182
        %p330 = pneg %p206
        %p331 = pneg %p203
        %p332 = pneg %p234
        %p333 = pneg %p231
        %s334 = sand.u32 %s221, 1
        %s335 = scalar_lea.sflag [#allocation7], %s334
        %s336 = sand.u32 %s221, 1
        %s337 = smul.addr %s336, 64
        %s338 = scalar_lea.vmem [#allocation8], %s337
        %s339 = smul.u32 2, %s31
        %p340 = scmp.eq.s32.totalorder %s31, 0
        // Predicated region
        $region57: #{tpu_custom_call.1} parent=51 // pred_check
          %p341 = pneg %p340
        $region58: #{tpu_custom_call.1} parent=51 // pred_check_branch
          %343 = sbr.rel (%p341) target = $region60
        $region59: #{tpu_custom_call.1} parent=51 // pred_region
          %v344 = vld [vmem:[%s306] sm:$0xff]
          %v345 = vld [vmem:[%s306 + $0x8] sm:$0xff]
          %v346 = vld [vmem:[%s306 + $0x10] sm:$0xff]
          %v347 = vld [vmem:[%s306 + $0x18] sm:$0xff]
          %v348 = vld [vmem:[%s306 + $0x20] sm:$0xff]
          %v349 = vld [vmem:[%s306 + $0x28] sm:$0xff]
          %v350 = vld [vmem:[%s306 + $0x30] sm:$0xff]
          %v351 = vld [vmem:[%s306 + $0x38] sm:$0xff]
          %v352 = vld [vmem:[%s3] sm:$0xff]
          %v353 = vld [vmem:[%s4] sm:$0xff]
          %355 = vset.pattern.permute.xlu0 0
          %356 = vperm.xlu0 %355, %v353
          %v357 = vpop.permute.xlu0 %356
          %vm359 = vcmask 261120
          %v361 = vsel %vm359, %v352, 0
          %363 = vmatprep.subr.mxu0 %v345
          %364 = vmatpush1.msra.mxu0 %v344
          %365 = vmatprep.subr.mxu0 %v347
          %366 = vmatpush1.msra.mxu0 %v346
          %367 = vmatprep.subr.mxu0 %v349
          %368 = vmatpush1.msra.mxu0 %v348
          %369 = vmatprep.subr.mxu0 %v351
          %370 = vmatpush1.msra.mxu0 %v350
          %371 = vmatprep.subr.mxu0 0.0
          %372 = vmatpush1.msra.mxu0 0.0
          %373 = vmatprep.subr.mxu0 0.0
          %374 = vmatpush1.msra.mxu0 0.0
          %375 = vmatprep.subr.mxu0 0.0
          %376 = vmatpush1.msra.mxu0 0.0
          %377 = vmatprep.subr.mxu0 0.0
          %378 = vmatpush1.msra.mxu0 0.0
          %379 = vmatprep.subr.mxu0 0.0
          %380 = vmatpush1.msra.mxu0 0.0
          %381 = vmatprep.subr.mxu0 0.0
          %382 = vmatpush1.msra.mxu0 0.0
          %383 = vmatprep.subr.mxu0 0.0
          %384 = vmatpush1.msra.mxu0 0.0
          %385 = vmatprep.subr.mxu0 0.0
          %386 = vmatpush1.msra.mxu0 0.0
          %387 = vmatprep.subr.mxu0 0.0
          %388 = vmatpush1.msra.mxu0 0.0
          %389 = vmatprep.subr.mxu0 0.0
          %390 = vmatpush1.msra.mxu0 0.0
          %391 = vmatprep.subr.mxu0 0.0
          %392 = vmatpush1.msra.mxu0 0.0
          %393 = vmatprep.subr.mxu0 0.0
          %394 = vmatpush1.msra.mxu0 0.0
          %395 = vmatprep.subr.mxu0 0.0
          %396 = vmatpush1.msra.mxu0 0.0
          %397 = vmatprep.subr.mxu0 0.0
          %398 = vmatpush1.msra.mxu0 0.0
          %399 = vmatprep.subr.mxu0 0.0
          %400 = vmatpush1.msra.mxu0 0.0
          %401 = vmatprep.subr.mxu0 0.0
          %402 = vmatpush1.msra.mxu0 0.0
          %403 = vmatprep.subr.mxu0 0.0
          %404 = vmatpush1.msra.mxu0 0.0
          %405 = vmatprep.subr.mxu0 0.0
          %406 = vmatpush1.msra.mxu0 0.0
          %407 = vmatprep.subr.mxu0 0.0
          %408 = vmatpush1.msra.mxu0 0.0
          %409 = vmatprep.subr.mxu0 0.0
          %410 = vmatpush1.msra.mxu0 0.0
          %411 = vmatprep.subr.mxu0 0.0
          %412 = vmatpush1.msra.mxu0 0.0
          %413 = vmatprep.subr.mxu0 0.0
          %414 = vmatpush1.msra.mxu0 0.0
          %415 = vmatprep.subr.mxu0 0.0
          %416 = vmatpush1.msra.mxu0 0.0
          %417 = vmatprep.subr.mxu0 0.0
          %418 = vmatpush1.msra.mxu0 0.0
          %419 = vmatprep.subr.mxu0 0.0
          %420 = vmatpush1.msra.mxu0 0.0
          %421 = vmatprep.subr.mxu0 0.0
          %422 = vmatpush1.msra.mxu0 0.0
          %423 = vmatprep.subr.mxu0 0.0
          %424 = vmatpush1.msra.mxu0 0.0
          %425 = vmatprep.subr.mxu0 0.0
          %426 = vmatpush1.msra.mxu0 0.0
          %427 = vmatprep.mubr.f32.mxu0 0.0
          %428 = vmatmul.mubr.f32.gmra.mrb[0].mxu0 %v361
          %v429 = vpop.f32.mrb[0].mxu0
          %v430 = vadd.f32 %v357, %v429
          %v431 = vpop.f32.mrb[0].mxu0
          %v432 = vadd.f32 %v357, %v431
          %433 = vdwg.mxu0
          %434 = vst [vmem:[#allocation2] sm:$0xff] %v430
          %435 = vst [vmem:[#allocation2 + $0x8] sm:$0xff] %v432
          %v436 = vld [vmem:[%s5] sm:$0xff]
          %v437 = vld [vmem:[%s5 + $0x8] sm:$0xff]
          %v438 = vld [vmem:[%s5 + $0x10] sm:$0xff]
          %v439 = vld [vmem:[%s5 + $0x18] sm:$0xff]
          %v440 = vld [vmem:[%s6] sm:$0xff]
          %v441 = vld [vmem:[%s6 + $0x8] sm:$0xff]
          %v442 = vld [vmem:[%s6 + $0x10] sm:$0xff]
          %v443 = vld [vmem:[%s6 + $0x18] sm:$0xff]
          %445 = vset.pattern.permute.xlu0 0
          %446 = vperm.xlu0 %445, %v440
          %v447 = vpop.permute.xlu0 %446
          %450 = vset.pattern.permute.xlu0 0
          %451 = vperm.xlu0 %450, %v441
          %v452 = vpop.permute.xlu0 %451
          %455 = vset.pattern.permute.xlu0 0
          %456 = vperm.xlu0 %455, %v442
          %v457 = vpop.permute.xlu0 %456
          %460 = vset.pattern.permute.xlu0 0
          %461 = vperm.xlu0 %460, %v443
          %v462 = vpop.permute.xlu0 %461
          %v465 = vsel %vm359, %v436, 0
          %v468 = vsel %vm359, %v437, 0
          %v471 = vsel %vm359, %v438, 0
          %v474 = vsel %vm359, %v439, 0
          %476 = vmatprep.subr.mxu0 %v345
          %477 = vmatpush1.msra.mxu0 %v344
          %478 = vmatprep.subr.mxu0 %v347
          %479 = vmatpush1.msra.mxu0 %v346
          %480 = vmatprep.subr.mxu0 %v349
          %481 = vmatpush1.msra.mxu0 %v348
          %482 = vmatprep.subr.mxu0 %v351
          %483 = vmatpush1.msra.mxu0 %v350
          %484 = vmatprep.subr.mxu0 0.0
          %485 = vmatpush1.msra.mxu0 0.0
          %486 = vmatprep.subr.mxu0 0.0
          %487 = vmatpush1.msra.mxu0 0.0
          %488 = vmatprep.subr.mxu0 0.0
          %489 = vmatpush1.msra.mxu0 0.0
          %490 = vmatprep.subr.mxu0 0.0
          %491 = vmatpush1.msra.mxu0 0.0
          %492 = vmatprep.subr.mxu0 0.0
          %493 = vmatpush1.msra.mxu0 0.0
          %494 = vmatprep.subr.mxu0 0.0
          %495 = vmatpush1.msra.mxu0 0.0
          %496 = vmatprep.subr.mxu0 0.0
          %497 = vmatpush1.msra.mxu0 0.0
          %498 = vmatprep.subr.mxu0 0.0
          %499 = vmatpush1.msra.mxu0 0.0
          %500 = vmatprep.subr.mxu0 0.0
          %501 = vmatpush1.msra.mxu0 0.0
          %502 = vmatprep.subr.mxu0 0.0
          %503 = vmatpush1.msra.mxu0 0.0
          %504 = vmatprep.subr.mxu0 0.0
          %505 = vmatpush1.msra.mxu0 0.0
          %506 = vmatprep.subr.mxu0 0.0
          %507 = vmatpush1.msra.mxu0 0.0
          %508 = vmatprep.subr.mxu0 0.0
          %509 = vmatpush1.msra.mxu0 0.0
          %510 = vmatprep.subr.mxu0 0.0
          %511 = vmatpush1.msra.mxu0 0.0
          %512 = vmatprep.subr.mxu0 0.0
          %513 = vmatpush1.msra.mxu0 0.0
          %514 = vmatprep.subr.mxu0 0.0
          %515 = vmatpush1.msra.mxu0 0.0
          %516 = vmatprep.subr.mxu0 0.0
          %517 = vmatpush1.msra.mxu0 0.0
          %518 = vmatprep.subr.mxu0 0.0
          %519 = vmatpush1.msra.mxu0 0.0
          %520 = vmatprep.subr.mxu0 0.0
          %521 = vmatpush1.msra.mxu0 0.0
          %522 = vmatprep.subr.mxu0 0.0
          %523 = vmatpush1.msra.mxu0 0.0
          %524 = vmatprep.subr.mxu0 0.0
          %525 = vmatpush1.msra.mxu0 0.0
          %526 = vmatprep.subr.mxu0 0.0
          %527 = vmatpush1.msra.mxu0 0.0
          %528 = vmatprep.subr.mxu0 0.0
          %529 = vmatpush1.msra.mxu0 0.0
          %530 = vmatprep.subr.mxu0 0.0
          %531 = vmatpush1.msra.mxu0 0.0
          %532 = vmatprep.subr.mxu0 0.0
          %533 = vmatpush1.msra.mxu0 0.0
          %534 = vmatprep.subr.mxu0 0.0
          %535 = vmatpush1.msra.mxu0 0.0
          %536 = vmatprep.subr.mxu0 0.0
          %537 = vmatpush1.msra.mxu0 0.0
          %538 = vmatprep.subr.mxu0 0.0
          %539 = vmatpush1.msra.mxu0 0.0
          %540 = vmatprep.mubr.f32.mxu0 0.0
          %541 = vmatmul.mubr.f32.gmra.mrb[0].mxu0 %v465
          %v542 = vpop.f32.mrb[0].mxu0
          %v543 = vadd.f32 %v447, %v542
          %v544 = vpop.f32.mrb[0].mxu0
          %v545 = vadd.f32 %v447, %v544
          %546 = vmatprep.mubr.f32.mxu0 0.0
          %547 = vmatmul.mubr.f32.gmra.mrb[0].mxu0 %v468
          %v548 = vpop.f32.mrb[0].mxu0
          %v549 = vadd.f32 %v452, %v548
          %v550 = vpop.f32.mrb[0].mxu0
          %v551 = vadd.f32 %v452, %v550
          %552 = vmatprep.mubr.f32.mxu0 0.0
          %553 = vmatmul.mubr.f32.gmra.mrb[0].mxu0 %v471
          %v554 = vpop.f32.mrb[0].mxu0
          %v555 = vadd.f32 %v457, %v554
          %v556 = vpop.f32.mrb[0].mxu0
          %v557 = vadd.f32 %v457, %v556
          %558 = vmatprep.mubr.f32.mxu0 0.0
          %559 = vmatmul.mubr.f32.gmra.mrb[0].mxu0 %v474
          %v560 = vpop.f32.mrb[0].mxu0
          %v561 = vadd.f32 %v462, %v560
          %v562 = vpop.f32.mrb[0].mxu0
          %v563 = vadd.f32 %v462, %v562
          %564 = vdwg.mxu0
          %565 = vst [vmem:[#allocation3] sm:$0xff] %v543
          %566 = vst [vmem:[#allocation3 + $0x8] sm:$0xff] %v545
          %567 = vst [vmem:[#allocation3 + $0x10] sm:$0xff] %v549
          %568 = vst [vmem:[#allocation3 + $0x18] sm:$0xff] %v551
          %569 = vst [vmem:[#allocation3 + $0x20] sm:$0xff] %v555
          %570 = vst [vmem:[#allocation3 + $0x28] sm:$0xff] %v557
          %571 = vst [vmem:[#allocation3 + $0x30] sm:$0xff] %v561
          %572 = vst [vmem:[#allocation3 + $0x38] sm:$0xff] %v563
        $region60: #{tpu_custom_call.1} parent=51 // pred_fallthru
          _
        %s573 = smul.u32 %s31, 256
        %s574 = sshra.s32 %s573, 7
        %s575 = sand.u32 %s573, 127
        %s576 = smul.addr %s574, 8
        %s577 = scalar_lea.vmem %s306, %s576 [#allocation5]
        %v578 = vld [vmem:[%s577] sm:$0xff]
        %v579 = vld [vmem:[%s577 + $0x8] sm:$0xff]
        %v580 = vld [vmem:[%s577 + $0x10] sm:$0xff]
        %v581 = vld [vmem:[%s577 + $0x18] sm:$0xff]
        %v582 = vld [vmem:[%s577 + $0x20] sm:$0xff]
        %v583 = vld [vmem:[%s577 + $0x28] sm:$0xff]
        %v584 = vld [vmem:[%s577 + $0x30] sm:$0xff]
        %v585 = vld [vmem:[%s577 + $0x38] sm:$0xff]
        %v586 = vld [vmem:[%s1] sm:$0xff]
        %v587 = vld [vmem:[%s2] sm:$0xff]
        %589 = vset.pattern.permute.xlu0 0
        %590 = vperm.xlu0 %589, %v587
        %v591 = vpop.permute.xlu0 %590
        %vm593 = vcmask 261120
        %v595 = vsel %vm593, %v586, 0
        %597 = vmatprep.subr.mxu0 %v579
        %598 = vmatpush1.msra.mxu0 %v578
        %599 = vmatprep.subr.mxu0 %v581
        %600 = vmatpush1.msra.mxu0 %v580
        %601 = vmatprep.subr.mxu0 %v583
        %602 = vmatpush1.msra.mxu0 %v582
        %603 = vmatprep.subr.mxu0 %v585
        %604 = vmatpush1.msra.mxu0 %v584
        %605 = vmatprep.subr.mxu0 0.0
        %606 = vmatpush1.msra.mxu0 0.0
        %607 = vmatprep.subr.mxu0 0.0
        %608 = vmatpush1.msra.mxu0 0.0
        %609 = vmatprep.subr.mxu0 0.0
        %610 = vmatpush1.msra.mxu0 0.0
        %611 = vmatprep.subr.mxu0 0.0
        %612 = vmatpush1.msra.mxu0 0.0
        %613 = vmatprep.subr.mxu0 0.0
        %614 = vmatpush1.msra.mxu0 0.0
        %615 = vmatprep.subr.mxu0 0.0
        %616 = vmatpush1.msra.mxu0 0.0
        %617 = vmatprep.subr.mxu0 0.0
        %618 = vmatpush1.msra.mxu0 0.0
        %619 = vmatprep.subr.mxu0 0.0
        %620 = vmatpush1.msra.mxu0 0.0
        %621 = vmatprep.subr.mxu0 0.0
        %622 = vmatpush1.msra.mxu0 0.0
        %623 = vmatprep.subr.mxu0 0.0
        %624 = vmatpush1.msra.mxu0 0.0
        %625 = vmatprep.subr.mxu0 0.0
        %626 = vmatpush1.msra.mxu0 0.0
        %627 = vmatprep.subr.mxu0 0.0
        %628 = vmatpush1.msra.mxu0 0.0
        %629 = vmatprep.subr.mxu0 0.0
        %630 = vmatpush1.msra.mxu0 0.0
        %631 = vmatprep.subr.mxu0 0.0
        %632 = vmatpush1.msra.mxu0 0.0
        %633 = vmatprep.subr.mxu0 0.0
        %634 = vmatpush1.msra.mxu0 0.0
        %635 = vmatprep.subr.mxu0 0.0
        %636 = vmatpush1.msra.mxu0 0.0
        %637 = vmatprep.subr.mxu0 0.0
        %638 = vmatpush1.msra.mxu0 0.0
        %639 = vmatprep.subr.mxu0 0.0
        %640 = vmatpush1.msra.mxu0 0.0
        %641 = vmatprep.subr.mxu0 0.0
        %642 = vmatpush1.msra.mxu0 0.0
        %643 = vmatprep.subr.mxu0 0.0
        %644 = vmatpush1.msra.mxu0 0.0
        %645 = vmatprep.subr.mxu0 0.0
        %646 = vmatpush1.msra.mxu0 0.0
        %647 = vmatprep.subr.mxu0 0.0
        %648 = vmatpush1.msra.mxu0 0.0
        %649 = vmatprep.subr.mxu0 0.0
        %650 = vmatpush1.msra.mxu0 0.0
        %651 = vmatprep.subr.mxu0 0.0
        %652 = vmatpush1.msra.mxu0 0.0
        %653 = vmatprep.subr.mxu0 0.0
        %654 = vmatpush1.msra.mxu0 0.0
        %655 = vmatprep.subr.mxu0 0.0
        %656 = vmatpush1.msra.mxu0 0.0
        %657 = vmatprep.subr.mxu0 0.0
        %658 = vmatpush1.msra.mxu0 0.0
        %659 = vmatprep.subr.mxu0 0.0
        %660 = vmatpush1.msra.mxu0 0.0
        %661 = vmatprep.mubr.f32.mxu0 0.0
        %662 = vmatmul.mubr.f32.gmra.mrb[0].mxu0 %v595
        %v663 = vpop.f32.mrb[0].mxu0
        %v664 = vadd.f32 %v591, %v663
        %v665 = vpop.f32.mrb[0].mxu0
        %v666 = vadd.f32 %v591, %v665
        %667 = vdwg.mxu0
        %v668 = vld [vmem:[#allocation2] sm:$0xff]
        %v669 = vld [vmem:[#allocation2 + $0x8] sm:$0xff]
        %670 = vxpose.xlu0.b32.start [1/16] %v668, 128
        %671 = vxpose.xlu0.b32.cont [2/16] 0.0, 128
        %672 = vxpose.xlu0.b32.cont [3/16] 0.0, 128
        %673 = vxpose.xlu0.b32.cont [4/16] 0.0, 128
        %674 = vxpose.xlu0.b32.cont [5/16] 0.0, 128
        %675 = vxpose.xlu0.b32.cont [6/16] 0.0, 128
        %676 = vxpose.xlu0.b32.cont [7/16] 0.0, 128
        %677 = vxpose.xlu0.b32.cont [8/16] 0.0, 128
        %678 = vxpose.xlu0.b32.cont [9/16] 0.0, 128
        %679 = vxpose.xlu0.b32.cont [10/16] 0.0, 128
        %680 = vxpose.xlu0.b32.cont [11/16] 0.0, 128
        %681 = vxpose.xlu0.b32.cont [12/16] 0.0, 128
        %682 = vxpose.xlu0.b32.cont [13/16] 0.0, 128
        %683 = vxpose.xlu0.b32.cont [14/16] 0.0, 128
        %684 = vxpose.xlu0.b32.cont [15/16] 0.0, 128
        %685 = vxpose.xlu0.b32.end [16/16] 0.0, 128
        %v686 = vpop.trf.xlu0
        %v687 = vpop.trf.xlu0
        %v688 = vpop.trf.xlu0
        %v689 = vpop.trf.xlu0
        %v690 = vpop.trf.xlu0
        %v691 = vpop.trf.xlu0
        %v692 = vpop.trf.xlu0
        %v693 = vpop.trf.xlu0
        %v694 = vpop.trf.xlu0
        %v695 = vpop.trf.xlu0
        %v696 = vpop.trf.xlu0
        %v697 = vpop.trf.xlu0
        %v698 = vpop.trf.xlu0
        %v699 = vpop.trf.xlu0
        %v700 = vpop.trf.xlu0
        %v701 = vpop.trf.xlu0
        %702 = vxpose.xlu0.b32.start [1/16] %v669, 128
        %703 = vxpose.xlu0.b32.cont [2/16] 0.0, 128
        %704 = vxpose.xlu0.b32.cont [3/16] 0.0, 128
        %705 = vxpose.xlu0.b32.cont [4/16] 0.0, 128
        %706 = vxpose.xlu0.b32.cont [5/16] 0.0, 128
        %707 = vxpose.xlu0.b32.cont [6/16] 0.0, 128
        %708 = vxpose.xlu0.b32.cont [7/16] 0.0, 128
        %709 = vxpose.xlu0.b32.cont [8/16] 0.0, 128
        %710 = vxpose.xlu0.b32.cont [9/16] 0.0, 128
        %711 = vxpose.xlu0.b32.cont [10/16] 0.0, 128
        %712 = vxpose.xlu0.b32.cont [11/16] 0.0, 128
        %713 = vxpose.xlu0.b32.cont [12/16] 0.0, 128
        %714 = vxpose.xlu0.b32.cont [13/16] 0.0, 128
        %715 = vxpose.xlu0.b32.cont [14/16] 0.0, 128
        %716 = vxpose.xlu0.b32.cont [15/16] 0.0, 128
        %717 = vxpose.xlu0.b32.end [16/16] 0.0, 128
        %v718 = vpop.trf.xlu0
        %v719 = vpop.trf.xlu0
        %v720 = vpop.trf.xlu0
        %v721 = vpop.trf.xlu0
        %v722 = vpop.trf.xlu0
        %v723 = vpop.trf.xlu0
        %v724 = vpop.trf.xlu0
        %v725 = vpop.trf.xlu0
        %v726 = vpop.trf.xlu0
        %v727 = vpop.trf.xlu0
        %v728 = vpop.trf.xlu0
        %v729 = vpop.trf.xlu0
        %v730 = vpop.trf.xlu0
        %v731 = vpop.trf.xlu0
        %v732 = vpop.trf.xlu0
        %v733 = vpop.trf.xlu0
        %vm734 = vcmask 64512
        %v736 = vsel %vm734, %v686, 0
        %v739 = vsel %vm734, %v687, 0
        %v742 = vsel %vm734, %v688, 0
        %v745 = vsel %vm734, %v689, 0
        %v748 = vsel %vm734, %v690, 0
        %v751 = vsel %vm734, %v691, 0
        %v754 = vsel %vm734, %v692, 0
        %v757 = vsel %vm734, %v693, 0
        %v760 = vsel %vm734, %v694, 0
        %v763 = vsel %vm734, %v695, 0
        %v766 = vsel %vm734, %v696, 0
        %v769 = vsel %vm734, %v697, 0
        %v772 = vsel %vm734, %v698, 0
        %v775 = vsel %vm734, %v699, 0
        %v778 = vsel %vm734, %v700, 0
        %v781 = vsel %vm734, %v701, 0
        %v784 = vsel %vm734, %v718, 0
        %v787 = vsel %vm734, %v719, 0
        %v790 = vsel %vm734, %v720, 0
        %v793 = vsel %vm734, %v721, 0
        %v796 = vsel %vm734, %v722, 0
        %v799 = vsel %vm734, %v723, 0
        %v802 = vsel %vm734, %v724, 0
        %v805 = vsel %vm734, %v725, 0
        %v808 = vsel %vm734, %v726, 0
        %v811 = vsel %vm734, %v727, 0
        %v814 = vsel %vm734, %v728, 0
        %v817 = vsel %vm734, %v729, 0
        %v820 = vsel %vm734, %v730, 0
        %v823 = vsel %vm734, %v731, 0
        %v826 = vsel %vm734, %v732, 0
        %v829 = vsel %vm734, %v733, 0
        %831 = vmatprep.subr.mxu0 %v666
        %832 = vmatpush1.msra.mxu0 %v664
        %833 = vmatprep.subr.mxu0 0.0
        %834 = vmatpush1.msra.mxu0 0.0
        %835 = vmatprep.subr.mxu0 0.0
        %836 = vmatpush1.msra.mxu0 0.0
        %837 = vmatprep.subr.mxu0 0.0
        %838 = vmatpush1.msra.mxu0 0.0
        %839 = vmatprep.subr.mxu0 0.0
        %840 = vmatpush1.msra.mxu0 0.0
        %841 = vmatprep.subr.mxu0 0.0
        %842 = vmatpush1.msra.mxu0 0.0
        %843 = vmatprep.subr.mxu0 0.0
        %844 = vmatpush1.msra.mxu0 0.0
        %845 = vmatprep.subr.mxu0 0.0
        %846 = vmatpush1.msra.mxu0 0.0
        %847 = vmatprep.subr.mxu0 0.0
        %848 = vmatpush1.msra.mxu0 0.0
        %849 = vmatprep.subr.mxu0 0.0
        %850 = vmatpush1.msra.mxu0 0.0
        %851 = vmatprep.subr.mxu0 0.0
        %852 = vmatpush1.msra.mxu0 0.0
        %853 = vmatprep.subr.mxu0 0.0
        %854 = vmatpush1.msra.mxu0 0.0
        %855 = vmatprep.subr.mxu0 0.0
        %856 = vmatpush1.msra.mxu0 0.0
        %857 = vmatprep.subr.mxu0 0.0
        %858 = vmatpush1.msra.mxu0 0.0
        %859 = vmatprep.subr.mxu0 0.0
        %860 = vmatpush1.msra.mxu0 0.0
        %861 = vmatprep.subr.mxu0 0.0
        %862 = vmatpush1.msra.mxu0 0.0
        %863 = vmatprep.subr.mxu0 0.0
        %864 = vmatpush1.msra.mxu0 0.0
        %865 = vmatprep.subr.mxu0 0.0
        %866 = vmatpush1.msra.mxu0 0.0
        %867 = vmatprep.subr.mxu0 0.0
        %868 = vmatpush1.msra.mxu0 0.0
        %869 = vmatprep.subr.mxu0 0.0
        %870 = vmatpush1.msra.mxu0 0.0
        %871 = vmatprep.subr.mxu0 0.0
        %872 = vmatpush1.msra.mxu0 0.0
        %873 = vmatprep.subr.mxu0 0.0
        %874 = vmatpush1.msra.mxu0 0.0
        %875 = vmatprep.subr.mxu0 0.0
        %876 = vmatpush1.msra.mxu0 0.0
        %877 = vmatprep.subr.mxu0 0.0
        %878 = vmatpush1.msra.mxu0 0.0
        %879 = vmatprep.subr.mxu0 0.0
        %880 = vmatpush1.msra.mxu0 0.0
        %881 = vmatprep.subr.mxu0 0.0
        %882 = vmatpush1.msra.mxu0 0.0
        %883 = vmatprep.subr.mxu0 0.0
        %884 = vmatpush1.msra.mxu0 0.0
        %885 = vmatprep.subr.mxu0 0.0
        %886 = vmatpush1.msra.mxu0 0.0
        %887 = vmatprep.subr.mxu0 0.0
        %888 = vmatpush1.msra.mxu0 0.0
        %889 = vmatprep.subr.mxu0 0.0
        %890 = vmatpush1.msra.mxu0 0.0
        %891 = vmatprep.subr.mxu0 0.0
        %892 = vmatpush1.msra.mxu0 0.0
        %893 = vmatprep.subr.mxu0 0.0
        %894 = vmatpush1.msra.mxu0 0.0
        %895 = vmatprep.mubr.f32.mxu0 0.0
        %896 = vmatmul.mubr.f32.gmra.mrb[0].mxu0 %v736
        %v897 = vpop.f32.mrb[0].mxu0
        %v898 = vadd.f32 0.0, %v897
        %v899 = vpop.f32.mrb[0].mxu0
        %v900 = vadd.f32 0.0, %v899
        %901 = vmatprep.mubr.f32.mxu0 0.0
        %902 = vmatmul.mubr.f32.gmra.mrb[0].mxu0 %v739
        %v903 = vpop.f32.mrb[0].mxu0
        %v904 = vadd.f32 0.0, %v903
        %v905 = vpop.f32.mrb[0].mxu0
        %v906 = vadd.f32 0.0, %v905
        %907 = vmatprep.mubr.f32.mxu0 0.0
        %908 = vmatmul.mubr.f32.gmra.mrb[0].mxu0 %v742
        %v909 = vpop.f32.mrb[0].mxu0
        %v910 = vadd.f32 0.0, %v909
        %v911 = vpop.f32.mrb[0].mxu0
        %v912 = vadd.f32 0.0, %v911
        %913 = vmatprep.mubr.f32.mxu0 0.0
        %914 = vmatmul.mubr.f32.gmra.mrb[0].mxu0 %v745
        %v915 = vpop.f32.mrb[0].mxu0
        %v916 = vadd.f32 0.0, %v915
        %v917 = vpop.f32.mrb[0].mxu0
        %v918 = vadd.f32 0.0, %v917
        %919 = vmatprep.mubr.f32.mxu0 0.0
        %920 = vmatmul.mubr.f32.gmra.mrb[0].mxu0 %v748
        %v921 = vpop.f32.mrb[0].mxu0
        %v922 = vadd.f32 0.0, %v921
        %v923 = vpop.f32.mrb[0].mxu0
        %v924 = vadd.f32 0.0, %v923
        %925 = vmatprep.mubr.f32.mxu0 0.0
        %926 = vmatmul.mubr.f32.gmra.mrb[0].mxu0 %v751
        %v927 = vpop.f32.mrb[0].mxu0
        %v928 = vadd.f32 0.0, %v927
        %v929 = vpop.f32.mrb[0].mxu0
        %v930 = vadd.f32 0.0, %v929
        %931 = vmatprep.mubr.f32.mxu0 0.0
        %932 = vmatmul.mubr.f32.gmra.mrb[0].mxu0 %v754
        %v933 = vpop.f32.mrb[0].mxu0
        %v934 = vadd.f32 0.0, %v933
        %v935 = vpop.f32.mrb[0].mxu0
        %v936 = vadd.f32 0.0, %v935
        %937 = vmatprep.mubr.f32.mxu0 0.0
        %938 = vmatmul.mubr.f32.gmra.mrb[0].mxu0 %v757
        %v939 = vpop.f32.mrb[0].mxu0
        %v940 = vadd.f32 0.0, %v939
        %v941 = vpop.f32.mrb[0].mxu0
        %v942 = vadd.f32 0.0, %v941
        %943 = vmatprep.mubr.f32.mxu0 0.0
        %944 = vmatmul.mubr.f32.gmra.mrb[0].mxu0 %v760
        %v945 = vpop.f32.mrb[0].mxu0
        %v946 = vadd.f32 0.0, %v945
        %v947 = vpop.f32.mrb[0].mxu0
        %v948 = vadd.f32 0.0, %v947
        %949 = vmatprep.mubr.f32.mxu0 0.0
        %950 = vmatmul.mubr.f32.gmra.mrb[0].mxu0 %v763
        %v951 = vpop.f32.mrb[0].mxu0
        %v952 = vadd.f32 0.0, %v951
        %v953 = vpop.f32.mrb[0].mxu0
        %v954 = vadd.f32 0.0, %v953
        %955 = vmatprep.mubr.f32.mxu0 0.0
        %956 = vmatmul.mubr.f32.gmra.mrb[0].mxu0 %v766
        %v957 = vpop.f32.mrb[0].mxu0
        %v958 = vadd.f32 0.0, %v957
        %v959 = vpop.f32.mrb[0].mxu0
        %v960 = vadd.f32 0.0, %v959
        %961 = vmatprep.mubr.f32.mxu0 0.0
        %962 = vmatmul.mubr.f32.gmra.mrb[0].mxu0 %v769
        %v963 = vpop.f32.mrb[0].mxu0
        %v964 = vadd.f32 0.0, %v963
        %v965 = vpop.f32.mrb[0].mxu0
        %v966 = vadd.f32 0.0, %v965
        %967 = vmatprep.mubr.f32.mxu0 0.0
        %968 = vmatmul.mubr.f32.gmra.mrb[0].mxu0 %v772
        %v969 = vpop.f32.mrb[0].mxu0
        %v970 = vadd.f32 0.0, %v969
        %v971 = vpop.f32.mrb[0].mxu0
        %v972 = vadd.f32 0.0, %v971
        %973 = vmatprep.mubr.f32.mxu0 0.0
        %974 = vmatmul.mubr.f32.gmra.mrb[0].mxu0 %v775
        %v975 = vpop.f32.mrb[0].mxu0
        %v976 = vadd.f32 0.0, %v975
        %v977 = vpop.f32.mrb[0].mxu0
        %v978 = vadd.f32 0.0, %v977
        %979 = vmatprep.mubr.f32.mxu0 0.0
        %980 = vmatmul.mubr.f32.gmra.mrb[0].mxu0 %v778
        %v981 = vpop.f32.mrb[0].mxu0
        %v982 = vadd.f32 0.0, %v981
        %v983 = vpop.f32.mrb[0].mxu0
        %v984 = vadd.f32 0.0, %v983
        %985 = vmatprep.mubr.f32.mxu0 0.0
        %986 = vmatmul.mubr.f32.gmra.mrb[0].mxu0 %v781
        %v987 = vpop.f32.mrb[0].mxu0
        %v988 = vadd.f32 0.0, %v987
        %v989 = vpop.f32.mrb[0].mxu0
        %v990 = vadd.f32 0.0, %v989
        %991 = vmatprep.mubr.f32.mxu0 0.0
        %992 = vmatmul.mubr.f32.gmra.mrb[0].mxu0 %v784
        %v993 = vpop.f32.mrb[0].mxu0
        %v994 = vadd.f32 0.0, %v993
        %v995 = vpop.f32.mrb[0].mxu0
        %v996 = vadd.f32 0.0, %v995
        %997 = vmatprep.mubr.f32.mxu0 0.0
        %998 = vmatmul.mubr.f32.gmra.mrb[0].mxu0 %v787
        %v999 = vpop.f32.mrb[0].mxu0
        %v1000 = vadd.f32 0.0, %v999
        %v1001 = vpop.f32.mrb[0].mxu0
        %v1002 = vadd.f32 0.0, %v1001
        %1003 = vmatprep.mubr.f32.mxu0 0.0
        %1004 = vmatmul.mubr.f32.gmra.mrb[0].mxu0 %v790
        %v1005 = vpop.f32.mrb[0].mxu0
        %v1006 = vadd.f32 0.0, %v1005
        %v1007 = vpop.f32.mrb[0].mxu0
        %v1008 = vadd.f32 0.0, %v1007
        %1009 = vmatprep.mubr.f32.mxu0 0.0
        %1010 = vmatmul.mubr.f32.gmra.mrb[0].mxu0 %v793
        %v1011 = vpop.f32.mrb[0].mxu0
        %v1012 = vadd.f32 0.0, %v1011
        %v1013 = vpop.f32.mrb[0].mxu0
        %v1014 = vadd.f32 0.0, %v1013
        %1015 = vmatprep.mubr.f32.mxu0 0.0
        %1016 = vmatmul.mubr.f32.gmra.mrb[0].mxu0 %v796
        %v1017 = vpop.f32.mrb[0].mxu0
        %v1018 = vadd.f32 0.0, %v1017
        %v1019 = vpop.f32.mrb[0].mxu0
        %v1020 = vadd.f32 0.0, %v1019
        %1021 = vmatprep.mubr.f32.mxu0 0.0
        %1022 = vmatmul.mubr.f32.gmra.mrb[0].mxu0 %v799
        %v1023 = vpop.f32.mrb[0].mxu0
        %v1024 = vadd.f32 0.0, %v1023
        %v1025 = vpop.f32.mrb[0].mxu0
        %v1026 = vadd.f32 0.0, %v1025
        %1027 = vmatprep.mubr.f32.mxu0 0.0
        %1028 = vmatmul.mubr.f32.gmra.mrb[0].mxu0 %v802
        %v1029 = vpop.f32.mrb[0].mxu0
        %v1030 = vadd.f32 0.0, %v1029
        %v1031 = vpop.f32.mrb[0].mxu0
        %v1032 = vadd.f32 0.0, %v1031
        %1033 = vmatprep.mubr.f32.mxu0 0.0
        %1034 = vmatmul.mubr.f32.gmra.mrb[0].mxu0 %v805
        %v1035 = vpop.f32.mrb[0].mxu0
        %v1036 = vadd.f32 0.0, %v1035
        %v1037 = vpop.f32.mrb[0].mxu0
        %v1038 = vadd.f32 0.0, %v1037
        %1039 = vmatprep.mubr.f32.mxu0 0.0
        %1040 = vmatmul.mubr.f32.gmra.mrb[0].mxu0 %v808
        %v1041 = vpop.f32.mrb[0].mxu0
        %v1042 = vadd.f32 0.0, %v1041
        %v1043 = vpop.f32.mrb[0].mxu0
        %v1044 = vadd.f32 0.0, %v1043
        %1045 = vmatprep.mubr.f32.mxu0 0.0
        %1046 = vmatmul.mubr.f32.gmra.mrb[0].mxu0 %v811
        %v1047 = vpop.f32.mrb[0].mxu0
        %v1048 = vadd.f32 0.0, %v1047
        %v1049 = vpop.f32.mrb[0].mxu0
        %v1050 = vadd.f32 0.0, %v1049
        %1051 = vmatprep.mubr.f32.mxu0 0.0
        %1052 = vmatmul.mubr.f32.gmra.mrb[0].mxu0 %v814
        %v1053 = vpop.f32.mrb[0].mxu0
        %v1054 = vadd.f32 0.0, %v1053
        %v1055 = vpop.f32.mrb[0].mxu0
        %v1056 = vadd.f32 0.0, %v1055
        %1057 = vmatprep.mubr.f32.mxu0 0.0
        %1058 = vmatmul.mubr.f32.gmra.mrb[0].mxu0 %v817
        %v1059 = vpop.f32.mrb[0].mxu0
        %v1060 = vadd.f32 0.0, %v1059
        %v1061 = vpop.f32.mrb[0].mxu0
        %v1062 = vadd.f32 0.0, %v1061
        %1063 = vmatprep.mubr.f32.mxu0 0.0
        %1064 = vmatmul.mubr.f32.gmra.mrb[0].mxu0 %v820
        %v1065 = vpop.f32.mrb[0].mxu0
        %v1066 = vadd.f32 0.0, %v1065
        %v1067 = vpop.f32.mrb[0].mxu0
        %v1068 = vadd.f32 0.0, %v1067
        %1069 = vmatprep.mubr.f32.mxu0 0.0
        %1070 = vmatmul.mubr.f32.gmra.mrb[0].mxu0 %v823
        %v1071 = vpop.f32.mrb[0].mxu0
        %v1072 = vadd.f32 0.0, %v1071
        %v1073 = vpop.f32.mrb[0].mxu0
        %v1074 = vadd.f32 0.0, %v1073
        %1075 = vmatprep.mubr.f32.mxu0 0.0
        %1076 = vmatmul.mubr.f32.gmra.mrb[0].mxu0 %v826
        %v1077 = vpop.f32.mrb[0].mxu0
        %v1078 = vadd.f32 0.0, %v1077
        %v1079 = vpop.f32.mrb[0].mxu0
        %v1080 = vadd.f32 0.0, %v1079
        %1081 = vmatprep.mubr.f32.mxu0 0.0
        %1082 = vmatmul.mubr.f32.gmra.mrb[0].mxu0 %v829
        %v1083 = vpop.f32.mrb[0].mxu0
        %v1084 = vadd.f32 0.0, %v1083
        %v1085 = vpop.f32.mrb[0].mxu0
        %v1086 = vadd.f32 0.0, %v1085
        %1087 = vdwg.mxu0
        %v1088 = vmax.f32 %v898, %v910
        %v1089 = vmax.f32 %v904, %v916
        %v1090 = vmax.f32 %v1088, %v922
        %v1091 = vmax.f32 %v1089, %v928
        %v1092 = vmax.f32 %v1090, %v934
        %v1093 = vmax.f32 %v1091, %v940
        %v1094 = vmax.f32 %v1092, %v946
        %v1095 = vmax.f32 %v1093, %v952
        %v1096 = vmax.f32 %v1094, %v958
        %v1097 = vmax.f32 %v1095, %v964
        %v1098 = vmax.f32 %v1096, %v970
        %v1099 = vmax.f32 %v1097, %v976
        %v1100 = vmax.f32 %v1098, %v982
        %v1101 = vmax.f32 %v1099, %v988
        %v1102 = vmax.f32 %v1100, %v994
        %v1103 = vmax.f32 %v1101, %v1000
        %v1104 = vmax.f32 %v1102, %v1006
        %v1105 = vmax.f32 %v1103, %v1012
        %v1106 = vmax.f32 %v1104, %v1018
        %v1107 = vmax.f32 %v1105, %v1024
        %v1108 = vmax.f32 %v1106, %v1030
        %v1109 = vmax.f32 %v1107, %v1036
        %v1110 = vmax.f32 %v1108, %v1042
        %v1111 = vmax.f32 %v1109, %v1048
        %v1112 = vmax.f32 %v1110, %v1054
        %v1113 = vmax.f32 %v1111, %v1060
        %v1114 = vmax.f32 %v1112, %v1066
        %v1115 = vmax.f32 %v1113, %v1072
        %v1116 = vmax.f32 %v1114, %v1078
        %v1117 = vmax.f32 %v1115, %v1084
        %v1118 = vmax.f32 %v1116, %v1117
        %v1119 = vrot.slane %v1118, 4
        %v1120 = vmax.f32 %v1118, %v1119
        %v1121 = vrot.slane %v1120, 2
        %v1122 = vmax.f32 %v1120, %v1121
        %v1123 = vrot.slane %v1122, 1
        %v1124 = vmax.f32 %v1122, %v1123
        %v1125 = vmax.f32 %v900, %v912
        %v1126 = vmax.f32 %v906, %v918
        %v1127 = vmax.f32 %v1125, %v924
        %v1128 = vmax.f32 %v1126, %v930
        %v1129 = vmax.f32 %v1127, %v936
        %v1130 = vmax.f32 %v1128, %v942
        %v1131 = vmax.f32 %v1129, %v948
        %v1132 = vmax.f32 %v1130, %v954
        %v1133 = vmax.f32 %v1131, %v960
        %v1134 = vmax.f32 %v1132, %v966
        %v1135 = vmax.f32 %v1133, %v972
        %v1136 = vmax.f32 %v1134, %v978
        %v1137 = vmax.f32 %v1135, %v984
        %v1138 = vmax.f32 %v1136, %v990
        %v1139 = vmax.f32 %v1137, %v996
        %v1140 = vmax.f32 %v1138, %v1002
        %v1141 = vmax.f32 %v1139, %v1008
        %v1142 = vmax.f32 %v1140, %v1014
        %v1143 = vmax.f32 %v1141, %v1020
        %v1144 = vmax.f32 %v1142, %v1026
        %v1145 = vmax.f32 %v1143, %v1032
        %v1146 = vmax.f32 %v1144, %v1038
        %v1147 = vmax.f32 %v1145, %v1044
        %v1148 = vmax.f32 %v1146, %v1050
        %v1149 = vmax.f32 %v1147, %v1056
        %v1150 = vmax.f32 %v1148, %v1062
        %v1151 = vmax.f32 %v1149, %v1068
        %v1152 = vmax.f32 %v1150, %v1074
        %v1153 = vmax.f32 %v1151, %v1080
        %v1154 = vmax.f32 %v1152, %v1086
        %v1155 = vmax.f32 %v1153, %v1154
        %v1156 = vrot.slane %v1155, 4
        %v1157 = vmax.f32 %v1155, %v1156
        %v1158 = vrot.slane %v1157, 2
        %v1159 = vmax.f32 %v1157, %v1158
        %v1160 = vrot.slane %v1159, 1
        %v1161 = vmax.f32 %v1159, %v1160
        %v1162 = vsub.f32 %v898, %v1124
        %v1163 = vsub.f32 %v900, %v1161
        %v1164 = vsub.f32 %v904, %v1124
        %v1165 = vsub.f32 %v906, %v1161
        %v1166 = vsub.f32 %v910, %v1124
        %v1167 = vsub.f32 %v912, %v1161
        %v1168 = vsub.f32 %v916, %v1124
        %v1169 = vsub.f32 %v918, %v1161
        %v1170 = vsub.f32 %v922, %v1124
        %v1171 = vsub.f32 %v924, %v1161
        %v1172 = vsub.f32 %v928, %v1124
        %v1173 = vsub.f32 %v930, %v1161
        %v1174 = vsub.f32 %v934, %v1124
        %v1175 = vsub.f32 %v936, %v1161
        %v1176 = vsub.f32 %v940, %v1124
        %v1177 = vsub.f32 %v942, %v1161
        %v1178 = vsub.f32 %v946, %v1124
        %v1179 = vsub.f32 %v948, %v1161
        %v1180 = vsub.f32 %v952, %v1124
        %v1181 = vsub.f32 %v954, %v1161
        %v1182 = vsub.f32 %v958, %v1124
        %v1183 = vsub.f32 %v960, %v1161
        %v1184 = vsub.f32 %v964, %v1124
        %v1185 = vsub.f32 %v966, %v1161
        %v1186 = vsub.f32 %v970, %v1124
        %v1187 = vsub.f32 %v972, %v1161
        %v1188 = vsub.f32 %v976, %v1124
        %v1189 = vsub.f32 %v978, %v1161
        %v1190 = vsub.f32 %v982, %v1124
        %v1191 = vsub.f32 %v984, %v1161
        %v1192 = vsub.f32 %v988, %v1124
        %v1193 = vsub.f32 %v990, %v1161
        %v1194 = vsub.f32 %v994, %v1124
        %v1195 = vsub.f32 %v996, %v1161
        %v1196 = vsub.f32 %v1000, %v1124
        %v1197 = vsub.f32 %v1002, %v1161
        %v1198 = vsub.f32 %v1006, %v1124
        %v1199 = vsub.f32 %v1008, %v1161
        %v1200 = vsub.f32 %v1012, %v1124
        %v1201 = vsub.f32 %v1014, %v1161
        %v1202 = vsub.f32 %v1018, %v1124
        %v1203 = vsub.f32 %v1020, %v1161
        %v1204 = vsub.f32 %v1024, %v1124
        %v1205 = vsub.f32 %v1026, %v1161
        %v1206 = vsub.f32 %v1030, %v1124
        %v1207 = vsub.f32 %v1032, %v1161
        %v1208 = vsub.f32 %v1036, %v1124
        %v1209 = vsub.f32 %v1038, %v1161
        %v1210 = vsub.f32 %v1042, %v1124
        %v1211 = vsub.f32 %v1044, %v1161
        %v1212 = vsub.f32 %v1048, %v1124
        %v1213 = vsub.f32 %v1050, %v1161
        %v1214 = vsub.f32 %v1054, %v1124
        %v1215 = vsub.f32 %v1056, %v1161
        %v1216 = vsub.f32 %v1060, %v1124
        %v1217 = vsub.f32 %v1062, %v1161
        %v1218 = vsub.f32 %v1066, %v1124
        %v1219 = vsub.f32 %v1068, %v1161
        %v1220 = vsub.f32 %v1072, %v1124
        %v1221 = vsub.f32 %v1074, %v1161
        %v1222 = vsub.f32 %v1078, %v1124
        %v1223 = vsub.f32 %v1080, %v1161
        %v1224 = vsub.f32 %v1084, %v1124
        %v1225 = vsub.f32 %v1086, %v1161
        %v1226 = vmul.f32 %v1162, 1.442695
        %v1227 = vpow.pop %v1226
        %v1228 = vmul.f32 %v1163, 1.442695
        %v1229 = vpow.pop %v1228
        %v1230 = vmul.f32 %v1164, 1.442695
        %v1231 = vpow.pop %v1230
        %v1232 = vmul.f32 %v1165, 1.442695
        %v1233 = vpow.pop %v1232
        %v1234 = vmul.f32 %v1166, 1.442695
        %v1235 = vpow.pop %v1234
        %v1236 = vmul.f32 %v1167, 1.442695
        %v1237 = vpow.pop %v1236
        %v1238 = vmul.f32 %v1168, 1.442695
        %v1239 = vpow.pop %v1238
        %v1240 = vmul.f32 %v1169, 1.442695
        %v1241 = vpow.pop %v1240
        %v1242 = vmul.f32 %v1170, 1.442695
        %v1243 = vpow.pop %v1242
        %v1244 = vmul.f32 %v1171, 1.442695
        %v1245 = vpow.pop %v1244
        %v1246 = vmul.f32 %v1172, 1.442695
        %v1247 = vpow.pop %v1246
        %v1248 = vmul.f32 %v1173, 1.442695
        %v1249 = vpow.pop %v1248
        %v1250 = vmul.f32 %v1174, 1.442695
        %v1251 = vpow.pop %v1250
        %v1252 = vmul.f32 %v1175, 1.442695
        %v1253 = vpow.pop %v1252
        %v1254 = vmul.f32 %v1176, 1.442695
        %v1255 = vpow.pop %v1254
        %v1256 = vmul.f32 %v1177, 1.442695
        %v1257 = vpow.pop %v1256
        %v1258 = vmul.f32 %v1178, 1.442695
        %v1259 = vpow.pop %v1258
        %v1260 = vmul.f32 %v1179, 1.442695
        %v1261 = vpow.pop %v1260
        %v1262 = vmul.f32 %v1180, 1.442695
        %v1263 = vpow.pop %v1262
        %v1264 = vmul.f32 %v1181, 1.442695
        %v1265 = vpow.pop %v1264
        %v1266 = vmul.f32 %v1182, 1.442695
        %v1267 = vpow.pop %v1266
        %v1268 = vmul.f32 %v1183, 1.442695
        %v1269 = vpow.pop %v1268
        %v1270 = vmul.f32 %v1184, 1.442695
        %v1271 = vpow.pop %v1270
        %v1272 = vmul.f32 %v1185, 1.442695
        %v1273 = vpow.pop %v1272
        %v1274 = vmul.f32 %v1186, 1.442695
        %v1275 = vpow.pop %v1274
        %v1276 = vmul.f32 %v1187, 1.442695
        %v1277 = vpow.pop %v1276
        %v1278 = vmul.f32 %v1188, 1.442695
        %v1279 = vpow.pop %v1278
        %v1280 = vmul.f32 %v1189, 1.442695
        %v1281 = vpow.pop %v1280
        %v1282 = vmul.f32 %v1190, 1.442695
        %v1283 = vpow.pop %v1282
        %v1284 = vmul.f32 %v1191, 1.442695
        %v1285 = vpow.pop %v1284
        %v1286 = vmul.f32 %v1192, 1.442695
        %v1287 = vpow.pop %v1286
        %v1288 = vmul.f32 %v1193, 1.442695
        %v1289 = vpow.pop %v1288
        %v1290 = vmul.f32 %v1194, 1.442695
        %v1291 = vpow.pop %v1290
        %v1292 = vmul.f32 %v1195, 1.442695
        %v1293 = vpow.pop %v1292
        %v1294 = vmul.f32 %v1196, 1.442695
        %v1295 = vpow.pop %v1294
        %v1296 = vmul.f32 %v1197, 1.442695
        %v1297 = vpow.pop %v1296
        %v1298 = vmul.f32 %v1198, 1.442695
        %v1299 = vpow.pop %v1298
        %v1300 = vmul.f32 %v1199, 1.442695
        %v1301 = vpow.pop %v1300
        %v1302 = vmul.f32 %v1200, 1.442695
        %v1303 = vpow.pop %v1302
        %v1304 = vmul.f32 %v1201, 1.442695
        %v1305 = vpow.pop %v1304
        %v1306 = vmul.f32 %v1202, 1.442695
        %v1307 = vpow.pop %v1306
        %v1308 = vmul.f32 %v1203, 1.442695
        %v1309 = vpow.pop %v1308
        %v1310 = vmul.f32 %v1204, 1.442695
        %v1311 = vpow.pop %v1310
        %v1312 = vmul.f32 %v1205, 1.442695
        %v1313 = vpow.pop %v1312
        %v1314 = vmul.f32 %v1206, 1.442695
        %v1315 = vpow.pop %v1314
        %v1316 = vmul.f32 %v1207, 1.442695
        %v1317 = vpow.pop %v1316
        %v1318 = vmul.f32 %v1208, 1.442695
        %v1319 = vpow.pop %v1318
        %v1320 = vmul.f32 %v1209, 1.442695
        %v1321 = vpow.pop %v1320
        %v1322 = vmul.f32 %v1210, 1.442695
        %v1323 = vpow.pop %v1322
        %v1324 = vmul.f32 %v1211, 1.442695
        %v1325 = vpow.pop %v1324
        %v1326 = vmul.f32 %v1212, 1.442695
        %v1327 = vpow.pop %v1326
        %v1328 = vmul.f32 %v1213, 1.442695
        %v1329 = vpow.pop %v1328
        %v1330 = vmul.f32 %v1214, 1.442695
        %v1331 = vpow.pop %v1330
        %v1332 = vmul.f32 %v1215, 1.442695
        %v1333 = vpow.pop %v1332
        %v1334 = vmul.f32 %v1216, 1.442695
        %v1335 = vpow.pop %v1334
        %v1336 = vmul.f32 %v1217, 1.442695
        %v1337 = vpow.pop %v1336
        %v1338 = vmul.f32 %v1218, 1.442695
        %v1339 = vpow.pop %v1338
        %v1340 = vmul.f32 %v1219, 1.442695
        %v1341 = vpow.pop %v1340
        %v1342 = vmul.f32 %v1220, 1.442695
        %v1343 = vpow.pop %v1342
        %v1344 = vmul.f32 %v1221, 1.442695
        %v1345 = vpow.pop %v1344
        %v1346 = vmul.f32 %v1222, 1.442695
        %v1347 = vpow.pop %v1346
        %v1348 = vmul.f32 %v1223, 1.442695
        %v1349 = vpow.pop %v1348
        %v1350 = vmul.f32 %v1224, 1.442695
        %v1351 = vpow.pop %v1350
        %v1352 = vmul.f32 %v1225, 1.442695
        %v1353 = vpow.pop %v1352
        %v1354 = vadd.f32 %v1227, %v1231
        %v1355 = vadd.f32 %v1354, %v1235
        %v1356 = vadd.f32 %v1355, %v1239
        %v1357 = vadd.f32 %v1356, %v1243
        %v1358 = vadd.f32 %v1357, %v1247
        %v1359 = vadd.f32 %v1358, %v1251
        %v1360 = vadd.f32 %v1359, %v1255
        %v1361 = vadd.f32 %v1360, %v1259
        %v1362 = vadd.f32 %v1361, %v1263
        %v1363 = vadd.f32 %v1362, %v1267
        %v1364 = vadd.f32 %v1363, %v1271
        %v1365 = vadd.f32 %v1364, %v1275
        %v1366 = vadd.f32 %v1365, %v1279
        %v1367 = vadd.f32 %v1366, %v1283
        %v1368 = vadd.f32 %v1367, %v1287
        %v1369 = vadd.f32 %v1368, %v1291
        %v1370 = vadd.f32 %v1369, %v1295
        %v1371 = vadd.f32 %v1370, %v1299
        %v1372 = vadd.f32 %v1371, %v1303
        %v1373 = vadd.f32 %v1372, %v1307
        %v1374 = vadd.f32 %v1373, %v1311
        %v1375 = vadd.f32 %v1374, %v1315
        %v1376 = vadd.f32 %v1375, %v1319
        %v1377 = vadd.f32 %v1376, %v1323
        %v1378 = vadd.f32 %v1377, %v1327
        %v1379 = vadd.f32 %v1378, %v1331
        %v1380 = vadd.f32 %v1379, %v1335
        %v1381 = vadd.f32 %v1380, %v1339
        %v1382 = vadd.f32 %v1381, %v1343
        %v1383 = vadd.f32 %v1382, %v1347
        %v1384 = vadd.f32 %v1383, %v1351
        %v1385 = vrot.slane %v1384, 4
        %v1386 = vadd.f32 %v1384, %v1385
        %v1387 = vrot.slane %v1386, 2
        %v1388 = vadd.f32 %v1386, %v1387
        %v1389 = vrot.slane %v1388, 1
        %v1390 = vadd.f32 %v1388, %v1389
        %v1391 = vadd.f32 %v1229, %v1233
        %v1392 = vadd.f32 %v1391, %v1237
        %v1393 = vadd.f32 %v1392, %v1241
        %v1394 = vadd.f32 %v1393, %v1245
        %v1395 = vadd.f32 %v1394, %v1249
        %v1396 = vadd.f32 %v1395, %v1253
        %v1397 = vadd.f32 %v1396, %v1257
        %v1398 = vadd.f32 %v1397, %v1261
        %v1399 = vadd.f32 %v1398, %v1265
        %v1400 = vadd.f32 %v1399, %v1269
        %v1401 = vadd.f32 %v1400, %v1273
        %v1402 = vadd.f32 %v1401, %v1277
        %v1403 = vadd.f32 %v1402, %v1281
        %v1404 = vadd.f32 %v1403, %v1285
        %v1405 = vadd.f32 %v1404, %v1289
        %v1406 = vadd.f32 %v1405, %v1293
        %v1407 = vadd.f32 %v1406, %v1297
        %v1408 = vadd.f32 %v1407, %v1301
        %v1409 = vadd.f32 %v1408, %v1305
        %v1410 = vadd.f32 %v1409, %v1309
        %v1411 = vadd.f32 %v1410, %v1313
        %v1412 = vadd.f32 %v1411, %v1317
        %v1413 = vadd.f32 %v1412, %v1321
        %v1414 = vadd.f32 %v1413, %v1325
        %v1415 = vadd.f32 %v1414, %v1329
        %v1416 = vadd.f32 %v1415, %v1333
        %v1417 = vadd.f32 %v1416, %v1337
        %v1418 = vadd.f32 %v1417, %v1341
        %v1419 = vadd.f32 %v1418, %v1345
        %v1420 = vadd.f32 %v1419, %v1349
        %v1421 = vadd.f32 %v1420, %v1353
        %v1422 = vrot.slane %v1421, 4
        %v1423 = vadd.f32 %v1421, %v1422
        %v1424 = vrot.slane %v1423, 2
        %v1425 = vadd.f32 %v1423, %v1424
        %v1426 = vrot.slane %v1425, 1
        %v1427 = vadd.f32 %v1425, %v1426
        %v1428 = vld [vmem:[#allocation3] sm:$0xff]
        %v1429 = vld [vmem:[#allocation3 + $0x8] sm:$0xff]
        %v1430 = vld [vmem:[#allocation3 + $0x10] sm:$0xff]
        %v1431 = vld [vmem:[#allocation3 + $0x18] sm:$0xff]
        %v1432 = vld [vmem:[#allocation3 + $0x20] sm:$0xff]
        %v1433 = vld [vmem:[#allocation3 + $0x28] sm:$0xff]
        %v1434 = vld [vmem:[#allocation3 + $0x30] sm:$0xff]
        %v1435 = vld [vmem:[#allocation3 + $0x38] sm:$0xff]
        %1436 = vmatprep.subr.mxu0 %v1229
        %1437 = vmatpush1.msra.mxu0 %v1227
        %1438 = vmatprep.subr.mxu0 %v1233
        %1439 = vmatpush1.msra.mxu0 %v1231
        %1440 = vmatprep.subr.mxu0 %v1237
        %1441 = vmatpush1.msra.mxu0 %v1235
        %1442 = vmatprep.subr.mxu0 %v1241
        %1443 = vmatpush1.msra.mxu0 %v1239
        %1444 = vmatprep.subr.mxu0 %v1245
        %1445 = vmatpush1.msra.mxu0 %v1243
        %1446 = vmatprep.subr.mxu0 %v1249
        %1447 = vmatpush1.msra.mxu0 %v1247
        %1448 = vmatprep.subr.mxu0 %v1253
        %1449 = vmatpush1.msra.mxu0 %v1251
        %1450 = vmatprep.subr.mxu0 %v1257
        %1451 = vmatpush1.msra.mxu0 %v1255
        %1452 = vmatprep.subr.mxu0 %v1261
        %1453 = vmatpush1.msra.mxu0 %v1259
        %1454 = vmatprep.subr.mxu0 %v1265
        %1455 = vmatpush1.msra.mxu0 %v1263
        %1456 = vmatprep.subr.mxu0 %v1269
        %1457 = vmatpush1.msra.mxu0 %v1267
        %1458 = vmatprep.subr.mxu0 %v1273
        %1459 = vmatpush1.msra.mxu0 %v1271
        %1460 = vmatprep.subr.mxu0 %v1277
        %1461 = vmatpush1.msra.mxu0 %v1275
        %1462 = vmatprep.subr.mxu0 %v1281
        %1463 = vmatpush1.msra.mxu0 %v1279
        %1464 = vmatprep.subr.mxu0 %v1285
        %1465 = vmatpush1.msra.mxu0 %v1283
        %1466 = vmatprep.subr.mxu0 %v1289
        %1467 = vmatpush1.msra.mxu0 %v1287
        %1468 = vmatprep.subr.mxu0 %v1293
        %1469 = vmatpush1.msra.mxu0 %v1291
        %1470 = vmatprep.subr.mxu0 %v1297
        %1471 = vmatpush1.msra.mxu0 %v1295
        %1472 = vmatprep.subr.mxu0 %v1301
        %1473 = vmatpush1.msra.mxu0 %v1299
        %1474 = vmatprep.subr.mxu0 %v1305
        %1475 = vmatpush1.msra.mxu0 %v1303
        %1476 = vmatprep.subr.mxu0 %v1309
        %1477 = vmatpush1.msra.mxu0 %v1307
        %1478 = vmatprep.subr.mxu0 %v1313
        %1479 = vmatpush1.msra.mxu0 %v1311
        %1480 = vmatprep.subr.mxu0 %v1317
        %1481 = vmatpush1.msra.mxu0 %v1315
        %1482 = vmatprep.subr.mxu0 %v1321
        %1483 = vmatpush1.msra.mxu0 %v1319
        %1484 = vmatprep.subr.mxu0 %v1325
        %1485 = vmatpush1.msra.mxu0 %v1323
        %1486 = vmatprep.subr.mxu0 %v1329
        %1487 = vmatpush1.msra.mxu0 %v1327
        %1488 = vmatprep.subr.mxu0 %v1333
        %1489 = vmatpush1.msra.mxu0 %v1331
        %1490 = vmatprep.subr.mxu0 %v1337
        %1491 = vmatpush1.msra.mxu0 %v1335
        %1492 = vmatprep.subr.mxu0 %v1341
        %1493 = vmatpush1.msra.mxu0 %v1339
        %1494 = vmatprep.subr.mxu0 %v1345
        %1495 = vmatpush1.msra.mxu0 %v1343
        %1496 = vmatprep.subr.mxu0 %v1349
        %1497 = vmatpush1.msra.mxu0 %v1347
        %1498 = vmatprep.subr.mxu0 %v1353
        %1499 = vmatpush1.msra.mxu0 %v1351
        %1500 = vmatprep.mubr.f32.mxu0 %v1429
        %1501 = vmatmul.mubr.f32.gmra.mrb[0].mxu0 %v1428
        %v1502 = vpop.f32.mrb[0].mxu0
        %v1503 = vadd.f32 0.0, %v1502
        %v1504 = vpop.f32.mrb[0].mxu0
        %v1505 = vadd.f32 0.0, %v1504
        %1506 = vmatprep.mubr.f32.mxu0 %v1431
        %1507 = vmatmul.mubr.f32.gmra.mrb[0].mxu0 %v1430
        %v1508 = vpop.f32.mrb[0].mxu0
        %v1509 = vadd.f32 0.0, %v1508
        %v1510 = vpop.f32.mrb[0].mxu0
        %v1511 = vadd.f32 0.0, %v1510
        %1512 = vmatprep.mubr.f32.mxu0 %v1433
        %1513 = vmatmul.mubr.f32.gmra.mrb[0].mxu0 %v1432
        %v1514 = vpop.f32.mrb[0].mxu0
        %v1515 = vadd.f32 0.0, %v1514
        %v1516 = vpop.f32.mrb[0].mxu0
        %v1517 = vadd.f32 0.0, %v1516
        %1518 = vmatprep.mubr.f32.mxu0 %v1435
        %1519 = vmatmul.mubr.f32.gmra.mrb[0].mxu0 %v1434
        %v1520 = vpop.f32.mrb[0].mxu0
        %v1521 = vadd.f32 0.0, %v1520
        %v1522 = vpop.f32.mrb[0].mxu0
        %v1523 = vadd.f32 0.0, %v1522
        %1524 = vdwg.mxu0
        %s1525 = sld [smem:[#allocation4]]
        %v1526 = vstv %s1525
        %v1527 = vrcp.pop %v1390
        %v1528 = vmul.f32 %v1526, %v1527
        %v1529 = vrcp.pop %v1427
        %v1530 = vmul.f32 %v1526, %v1529
        %v1531 = vmul.f32 %v1503, %v1528
        %v1532 = vmul.f32 %v1505, %v1530
        %v1533 = vmul.f32 %v1509, %v1528
        %v1534 = vmul.f32 %v1511, %v1530
        %v1535 = vmul.f32 %v1515, %v1528
        %v1536 = vmul.f32 %v1517, %v1530
        %v1537 = vmul.f32 %v1521, %v1528
        %v1538 = vmul.f32 %v1523, %v1530
        %v1539 = vadd.f32 %v1531, %v578
        %v1540 = vadd.f32 %v1532, %v579
        %v1541 = vadd.f32 %v1533, %v580
        %v1542 = vadd.f32 %v1534, %v581
        %v1543 = vadd.f32 %v1535, %v582
        %v1544 = vadd.f32 %v1536, %v583
        %v1545 = vadd.f32 %v1537, %v584
        %v1546 = vadd.f32 %v1538, %v585
        %1547 = vst [vmem:[%s338] sm:$0xff] %v1539
        %1548 = vst [vmem:[%s338 + $0x8] sm:$0xff] %v1540
        %1549 = vst [vmem:[%s338 + $0x10] sm:$0xff] %v1541
        %1550 = vst [vmem:[%s338 + $0x18] sm:$0xff] %v1542
        %1551 = vst [vmem:[%s338 + $0x20] sm:$0xff] %v1543
        %1552 = vst [vmem:[%s338 + $0x28] sm:$0xff] %v1544
        %1553 = vst [vmem:[%s338 + $0x30] sm:$0xff] %v1545
        %1554 = vst [vmem:[%s338 + $0x38] sm:$0xff] %v1546
        %s1555 = sand.u32 %s221, 1
        %s1556 = scalar_lea.sflag [#allocation7], %s1555
        %s1557 = sand.u32 %s221, 1
        %s1558 = smul.addr %s1557, 64
        %s1559 = scalar_lea.vmem [#allocation8], %s1558
        // Predicated region
        $region61: #{tpu_custom_call.1} parent=51 // pred_check
          %p1560 = pneg %p231
        $region62: #{tpu_custom_call.1} parent=51 // pred_check_branch
          %1562 = sbr.rel (%p1560) target = $region64
        $region63: #{tpu_custom_call.1} parent=51 // pred_region
          %s1563 = smul.u32 2, %s31
          %s1565 = ssub.s32 1024, 1024
          %1566 = vsyncadd %s1556, %s1565
          %s1567 = smul.addr %s30, 8
          %s1568 = sadd.s32 %s1563, %s1567
          %s1569 = smul.addr %s1568, 128
          %s1570 = scalar_lea.hbm %s8, %s1569
          %s1571 = sshll.u32 %s1559, 4
          %s1572 = int_to_ptr.vmem [resolvable:$true] %s1571
          %1577 = dma.vmem_to_hbm [thread:$0]  %s1572, 1024, %s1570, %s1556, 256, 256, 16
        $region64: #{tpu_custom_call.1} parent=51 // pred_fallthru
          _
      $region52: #{tpu_custom_call.1} parent=5 // pred_fallthru
        _
      %p1578 = scmp.le.s32.totalorder 2, %s21
      // Predicated region
      $region65: #{tpu_custom_call.1} parent=5 // pred_check
        %p1579 = pneg %p1578
      $region66: #{tpu_custom_call.1} parent=5 // pred_check_branch
        %1581 = sbr.rel (%p1579) target = $region68
      $region67: #{tpu_custom_call.1} parent=5 // pred_region
        %s1582 = ssub.s32 %s21, 2
        // Predicated region
        $region69: #{tpu_custom_call.1} parent=67 // pred_check
          %p1583 = pneg %p237
        $region70: #{tpu_custom_call.1} parent=67 // pred_check_branch
          %1585 = sbr.rel (%p1583) target = $region72
        $region71: #{tpu_custom_call.1} parent=67 // pred_region
          %s1586 = sand.u32 %s222, 1
          %s1587 = scalar_lea.sflag [#allocation7], %s1586
          %s1588 = sand.u32 %s222, 1
          %s1589 = smul.addr %s1588, 64
          %s1590 = scalar_lea.vmem [#allocation8], %s1589
          %1591 = dma.done %s1587, 1024
        $region72: #{tpu_custom_call.1} parent=67 // pred_fallthru
          _
      $region68: #{tpu_custom_call.1} parent=5 // pred_fallthru
        _
    $region6: #{tpu_custom_call.1} parent=1 // loop_footer
      %s25 = sadd.s32 1, %s21
    $region7: #{tpu_custom_call.1} parent=1 // loop_footer_branch
      %20 = sbr.rel target = $region3
    $region8: #{tpu_custom_call.1} parent=1 // loop_exit
      _
    %1592 = vsyncpa [#allocation6], 1
    %s1593 = scalar_lea.sflag [#allocation6], 1
    %1594 = vsyncpa %s1593, 1
    %1595 = vsyncpa [#allocation7], 1
    %s1596 = scalar_lea.sflag [#allocation7], 1
    %1597 = vsyncpa %s1596, 1

</llo_original>
